<compile_context>
chip_gen: v7x
topology: tpu7x:2x2x1
jax: 0.10.0
libtpu: 0.0.40
codegen_flags: <defaults>
</compile_context>

<pallas_src>
import functools

import jax
import jax.numpy as jnp
from jax.experimental import pallas as pl
from jax.experimental.pallas import tpu as pltpu


def _downsample_kernel(x_ref, w_ref, b_ref, o_ref, *, cin, cout, hout, wout):
    """One batch element per grid step.

    x_ref : (1, 4*cin, hout+1, wout+1)  space-to-depth'd, front-padded input
    w_ref : (9, cout, cin)              conv taps, tap index = kh*3 + kw
    b_ref : (cout, 1)                   bias
    o_ref : (1, cout, hout*wout)        lane-dense output (spatial flattened)
    """
    hw = hout * wout
    # kernel-tap index (0,1,2) -> (phase along that axis, offset into the
    # front-padded block axis).  Derivation: input coord 2*o + k - 1:
    #   k=0 -> phase 1, block o-1 -> padded index o   (offset 0)
    #   k=1 -> phase 0, block o   -> padded index o+1 (offset 1)
    #   k=2 -> phase 1, block o   -> padded index o+1 (offset 1)
    tap = ((1, 0), (0, 1), (1, 1))

    acc = jnp.zeros((cout, hw), dtype=jnp.float32)
    for kh in range(3):
        p, i0 = tap[kh]
        for kw in range(3):
            q, j0 = tap[kw]
            ph = 2 * p + q
            # Static, unit-stride sub-block load of this tap's input.
            patch = x_ref[0, ph * cin:(ph + 1) * cin,
                          i0:i0 + hout, j0:j0 + wout]          # (cin, hout, wout)
            patch = patch.reshape(cin, hw).astype(jnp.float32)  # lane-dense
            wt = w_ref[kh * 3 + kw]                              # (cout, cin) f32

            if cin <= 8:
                # Tiny channel count: unrolled VPU multiply-accumulate
                # (outer-product broadcast); exact f32, MXU not worth feeding.
                for ci in range(cin):
                    acc = acc + wt[:, ci:ci + 1] * patch[ci:ci + 1, :]
            else:
                # Large channel count: MXU matmul, f32 accumulation.
                acc = acc + jnp.dot(wt, patch,
                                    preferred_element_type=jnp.float32)

    acc = acc + b_ref[...]                                       # (cout, 1) bcast
    o_ref[0] = acc.astype(o_ref.dtype)


def downsample_forward(x, conv_w, conv_b):
    """x: (N, C, H, W) NCHW.  conv_w: (C, C, 3, 3) OIHW.  conv_b: (C,)."""
    N, C, H, W = x.shape
    Cout = conv_w.shape[0]
    assert H % 2 == 0 and W % 2 == 0, "Downsample kernel requires even H, W"
    Ho, Wo = H // 2, W // 2

    # --- wrapper-side data prep (one fused XLA copy of x, tiny weight ops) ---
    # Space-to-depth: x[n, c, 2i+p, 2j+q] -> xp[n, (2p+q)*C + c, i, j]
    xp = x.reshape(N, C, Ho, 2, Wo, 2)
    xp = jnp.transpose(xp, (0, 3, 5, 1, 2, 4)).reshape(N, 4 * C, Ho, Wo)
    # Front-pad block axes by 1: the kh=0 / kw=0 taps (which read input
    # row/col -1, i.e. the conv's zero padding) become plain static slices.
    xpp = jnp.pad(xp, ((0, 0), (0, 0), (1, 0), (1, 0)))          # (N, 4C, Ho+1, Wo+1)

    # Hoist all weight prep out of the per-step path:
    # (Cout, Cin, 3, 3) -> (9, Cout, Cin), pre-cast to f32.
    w_taps = jnp.transpose(conv_w, (2, 3, 0, 1)).reshape(9, Cout, C)
    w_taps = w_taps.astype(jnp.float32)
    b2 = conv_b.reshape(Cout, 1).astype(jnp.float32)

    out_flat = pl.pallas_call(
        functools.partial(_downsample_kernel,
                          cin=C, cout=Cout, hout=Ho, wout=Wo),
        out_shape=jax.ShapeDtypeStruct((N, Cout, Ho * Wo), x.dtype),
        grid_spec=pltpu.PrefetchScalarGridSpec(
            num_scalar_prefetch=0,
            grid=(N,),
            in_specs=[
                pl.BlockSpec((1, 4 * C, Ho + 1, Wo + 1),
                             lambda n: (n, 0, 0, 0)),            # input (per batch)
                pl.BlockSpec((9, Cout, C), lambda n: (0, 0, 0)),  # conv taps
                pl.BlockSpec((Cout, 1), lambda n: (0, 0)),        # bias
            ],
            out_specs=pl.BlockSpec((1, Cout, Ho * Wo), lambda n: (n, 0, 0)),
        ),
        compiler_params=pltpu.CompilerParams(
            dimension_semantics=("parallel",)),
    )(xpp, w_taps, b2)

    # Contiguous (copy-free) reshape back to NCHW.
    return out_flat.reshape(N, Cout, Ho, Wo)


def _reference(x, conv_w, conv_b):
    y = jax.lax.conv_general_dilated(
        x, conv_w, window_strides=(2, 2), padding=((1, 1), (1, 1)),
        dimension_numbers=("NCHW", "OIHW", "NCHW"),
        precision=jax.lax.Precision.HIGHEST)
    return y + conv_b.reshape(1, -1, 1, 1)


if __name__ == "__main__":
    key = jax.random.PRNGKey(0)
    N, C, H, W = 2, 4, 16, 16

    kx, kw, kb = jax.random.split(key, 3)
    x = jax.random.normal(kx, (N, C, H, W), dtype=jnp.float32)
    conv_w = jax.random.normal(kw, (C, C, 3, 3), dtype=jnp.float32) * 0.1
    conv_b = jax.random.normal(kb, (C,), dtype=jnp.float32) * 0.1

    out = downsample_forward(x, conv_w, conv_b)
    out = jax.block_until_ready(out)

    ref = _reference(x, conv_w, conv_b)
    assert out.shape == (N, C, H // 2, W // 2)
    max_err = float(jnp.max(jnp.abs(out - ref)))
    assert jnp.allclose(out, ref, atol=1e-4, rtol=1e-4), max_err

    print("KERNEL_OK")
</pallas_src>

<mosaic_0001>
module attributes {stable_mosaic.version = 11 : i64} {
  func.func @_downsample_kernel(%arg0: i32, %arg1: memref<1x16x9x9xf32, #tpu.memory_space<vmem>>, %arg2: memref<9x4x4xf32, #tpu.memory_space<vmem>>, %arg3: memref<4x1xf32, #tpu.memory_space<vmem>>, %arg4: memref<1x4x64xf32, #tpu.memory_space<vmem>>) attributes {dimension_semantics = [#tpu.dimension_semantics<parallel>], iteration_bounds = array<i64: 2>, scalar_prefetch = 0 : i64, scratch_operands = 0 : i64, tpu.core_type = #tpu.core_type<tc>, window_params = [{transform_indices = @transform_0, window_bounds = array<i64: 1, 16, 9, 9>}, {pipeline_mode = #tpu.pipeline_mode<synchronous>, transform_indices = @transform_1, window_bounds = array<i64: 9, 4, 4>}, {pipeline_mode = #tpu.pipeline_mode<synchronous>, transform_indices = @transform_2, window_bounds = array<i64: 4, 1>}, {transform_indices = @transform_3, window_bounds = array<i64: 1, 4, 64>}]} {
    %cst = arith.constant 0.000000e+00 : f32
    %0 = vector.broadcast %cst : f32 to vector<4x64xf32>
    %c0 = arith.constant 0 : index
    %c12 = arith.constant 12 : index
    %c0_0 = arith.constant 0 : index
    %c0_1 = arith.constant 0 : index
    %1 = vector.load %arg1[%c0, %c12, %c0_0, %c0_1] : memref<1x16x9x9xf32, #tpu.memory_space<vmem>>, vector<1x4x8x8xf32>
    %2 = vector.shape_cast %1 : vector<1x4x8x8xf32> to vector<4x8x8xf32>
    %3 = vector.shape_cast %2 : vector<4x8x8xf32> to vector<4x64xf32>
    %c0_2 = arith.constant 0 : index
    %c0_3 = arith.constant 0 : index
    %c0_4 = arith.constant 0 : index
    %4 = vector.load %arg2[%c0_2, %c0_3, %c0_4] : memref<9x4x4xf32, #tpu.memory_space<vmem>>, vector<1x4x4xf32>
    %5 = vector.shape_cast %4 : vector<1x4x4xf32> to vector<4x4xf32>
    %6 = vector.extract_strided_slice %5 {offsets = [0, 0], sizes = [4, 1], strides = [1, 1]} : vector<4x4xf32> to vector<4x1xf32>
    %7 = vector.extract_strided_slice %3 {offsets = [0, 0], sizes = [1, 64], strides = [1, 1]} : vector<4x64xf32> to vector<1x64xf32>
    %8 = vector.broadcast %6 : vector<4x1xf32> to vector<4x64xf32>
    %9 = vector.broadcast %7 : vector<1x64xf32> to vector<4x64xf32>
    %10 = arith.mulf %8, %9 : vector<4x64xf32>
    %11 = arith.addf %0, %10 : vector<4x64xf32>
    %12 = vector.extract_strided_slice %5 {offsets = [0, 1], sizes = [4, 1], strides = [1, 1]} : vector<4x4xf32> to vector<4x1xf32>
    %13 = vector.extract_strided_slice %3 {offsets = [1, 0], sizes = [1, 64], strides = [1, 1]} : vector<4x64xf32> to vector<1x64xf32>
    %14 = vector.broadcast %12 : vector<4x1xf32> to vector<4x64xf32>
    %15 = vector.broadcast %13 : vector<1x64xf32> to vector<4x64xf32>
    %16 = arith.mulf %14, %15 : vector<4x64xf32>
    %17 = arith.addf %11, %16 : vector<4x64xf32>
    %18 = vector.extract_strided_slice %5 {offsets = [0, 2], sizes = [4, 1], strides = [1, 1]} : vector<4x4xf32> to vector<4x1xf32>
    %19 = vector.extract_strided_slice %3 {offsets = [2, 0], sizes = [1, 64], strides = [1, 1]} : vector<4x64xf32> to vector<1x64xf32>
    %20 = vector.broadcast %18 : vector<4x1xf32> to vector<4x64xf32>
    %21 = vector.broadcast %19 : vector<1x64xf32> to vector<4x64xf32>
    %22 = arith.mulf %20, %21 : vector<4x64xf32>
    %23 = arith.addf %17, %22 : vector<4x64xf32>
    %24 = vector.extract_strided_slice %5 {offsets = [0, 3], sizes = [4, 1], strides = [1, 1]} : vector<4x4xf32> to vector<4x1xf32>
    %25 = vector.extract_strided_slice %3 {offsets = [3, 0], sizes = [1, 64], strides = [1, 1]} : vector<4x64xf32> to vector<1x64xf32>
    %26 = vector.broadcast %24 : vector<4x1xf32> to vector<4x64xf32>
    %27 = vector.broadcast %25 : vector<1x64xf32> to vector<4x64xf32>
    %28 = arith.mulf %26, %27 : vector<4x64xf32>
    %29 = arith.addf %23, %28 : vector<4x64xf32>
    %c0_5 = arith.constant 0 : index
    %c8 = arith.constant 8 : index
    %c0_6 = arith.constant 0 : index
    %c1 = arith.constant 1 : index
    %30 = vector.load %arg1[%c0_5, %c8, %c0_6, %c1] : memref<1x16x9x9xf32, #tpu.memory_space<vmem>>, vector<1x4x8x8xf32>
    %31 = vector.shape_cast %30 : vector<1x4x8x8xf32> to vector<4x8x8xf32>
    %32 = vector.shape_cast %31 : vector<4x8x8xf32> to vector<4x64xf32>
    %c1_7 = arith.constant 1 : index
    %c0_8 = arith.constant 0 : index
    %c0_9 = arith.constant 0 : index
    %33 = vector.load %arg2[%c1_7, %c0_8, %c0_9] : memref<9x4x4xf32, #tpu.memory_space<vmem>>, vector<1x4x4xf32>
    %34 = vector.shape_cast %33 : vector<1x4x4xf32> to vector<4x4xf32>
    %35 = vector.extract_strided_slice %34 {offsets = [0, 0], sizes = [4, 1], strides = [1, 1]} : vector<4x4xf32> to vector<4x1xf32>
    %36 = vector.extract_strided_slice %32 {offsets = [0, 0], sizes = [1, 64], strides = [1, 1]} : vector<4x64xf32> to vector<1x64xf32>
    %37 = vector.broadcast %35 : vector<4x1xf32> to vector<4x64xf32>
    %38 = vector.broadcast %36 : vector<1x64xf32> to vector<4x64xf32>
    %39 = arith.mulf %37, %38 : vector<4x64xf32>
    %40 = arith.addf %29, %39 : vector<4x64xf32>
    %41 = vector.extract_strided_slice %34 {offsets = [0, 1], sizes = [4, 1], strides = [1, 1]} : vector<4x4xf32> to vector<4x1xf32>
    %42 = vector.extract_strided_slice %32 {offsets = [1, 0], sizes = [1, 64], strides = [1, 1]} : vector<4x64xf32> to vector<1x64xf32>
    %43 = vector.broadcast %41 : vector<4x1xf32> to vector<4x64xf32>
    %44 = vector.broadcast %42 : vector<1x64xf32> to vector<4x64xf32>
    %45 = arith.mulf %43, %44 : vector<4x64xf32>
    %46 = arith.addf %40, %45 : vector<4x64xf32>
    %47 = vector.extract_strided_slice %34 {offsets = [0, 2], sizes = [4, 1], strides = [1, 1]} : vector<4x4xf32> to vector<4x1xf32>
    %48 = vector.extract_strided_slice %32 {offsets = [2, 0], sizes = [1, 64], strides = [1, 1]} : vector<4x64xf32> to vector<1x64xf32>
    %49 = vector.broadcast %47 : vector<4x1xf32> to vector<4x64xf32>
    %50 = vector.broadcast %48 : vector<1x64xf32> to vector<4x64xf32>
    %51 = arith.mulf %49, %50 : vector<4x64xf32>
    %52 = arith.addf %46, %51 : vector<4x64xf32>
    %53 = vector.extract_strided_slice %34 {offsets = [0, 3], sizes = [4, 1], strides = [1, 1]} : vector<4x4xf32> to vector<4x1xf32>
    %54 = vector.extract_strided_slice %32 {offsets = [3, 0], sizes = [1, 64], strides = [1, 1]} : vector<4x64xf32> to vector<1x64xf32>
    %55 = vector.broadcast %53 : vector<4x1xf32> to vector<4x64xf32>
    %56 = vector.broadcast %54 : vector<1x64xf32> to vector<4x64xf32>
    %57 = arith.mulf %55, %56 : vector<4x64xf32>
    %58 = arith.addf %52, %57 : vector<4x64xf32>
    %c0_10 = arith.constant 0 : index
    %c12_11 = arith.constant 12 : index
    %c0_12 = arith.constant 0 : index
    %c1_13 = arith.constant 1 : index
    %59 = vector.load %arg1[%c0_10, %c12_11, %c0_12, %c1_13] : memref<1x16x9x9xf32, #tpu.memory_space<vmem>>, vector<1x4x8x8xf32>
    %60 = vector.shape_cast %59 : vector<1x4x8x8xf32> to vector<4x8x8xf32>
    %61 = vector.shape_cast %60 : vector<4x8x8xf32> to vector<4x64xf32>
    %c2 = arith.constant 2 : index
    %c0_14 = arith.constant 0 : index
    %c0_15 = arith.constant 0 : index
    %62 = vector.load %arg2[%c2, %c0_14, %c0_15] : memref<9x4x4xf32, #tpu.memory_space<vmem>>, vector<1x4x4xf32>
    %63 = vector.shape_cast %62 : vector<1x4x4xf32> to vector<4x4xf32>
    %64 = vector.extract_strided_slice %63 {offsets = [0, 0], sizes = [4, 1], strides = [1, 1]} : vector<4x4xf32> to vector<4x1xf32>
    %65 = vector.extract_strided_slice %61 {offsets = [0, 0], sizes = [1, 64], strides = [1, 1]} : vector<4x64xf32> to vector<1x64xf32>
    %66 = vector.broadcast %64 : vector<4x1xf32> to vector<4x64xf32>
    %67 = vector.broadcast %65 : vector<1x64xf32> to vector<4x64xf32>
    %68 = arith.mulf %66, %67 : vector<4x64xf32>
    %69 = arith.addf %58, %68 : vector<4x64xf32>
    %70 = vector.extract_strided_slice %63 {offsets = [0, 1], sizes = [4, 1], strides = [1, 1]} : vector<4x4xf32> to vector<4x1xf32>
    %71 = vector.extract_strided_slice %61 {offsets = [1, 0], sizes = [1, 64], strides = [1, 1]} : vector<4x64xf32> to vector<1x64xf32>
    %72 = vector.broadcast %70 : vector<4x1xf32> to vector<4x64xf32>
    %73 = vector.broadcast %71 : vector<1x64xf32> to vector<4x64xf32>
    %74 = arith.mulf %72, %73 : vector<4x64xf32>
    %75 = arith.addf %69, %74 : vector<4x64xf32>
    %76 = vector.extract_strided_slice %63 {offsets = [0, 2], sizes = [4, 1], strides = [1, 1]} : vector<4x4xf32> to vector<4x1xf32>
    %77 = vector.extract_strided_slice %61 {offsets = [2, 0], sizes = [1, 64], strides = [1, 1]} : vector<4x64xf32> to vector<1x64xf32>
    %78 = vector.broadcast %76 : vector<4x1xf32> to vector<4x64xf32>
    %79 = vector.broadcast %77 : vector<1x64xf32> to vector<4x64xf32>
    %80 = arith.mulf %78, %79 : vector<4x64xf32>
    %81 = arith.addf %75, %80 : vector<4x64xf32>
    %82 = vector.extract_strided_slice %63 {offsets = [0, 3], sizes = [4, 1], strides = [1, 1]} : vector<4x4xf32> to vector<4x1xf32>
    %83 = vector.extract_strided_slice %61 {offsets = [3, 0], sizes = [1, 64], strides = [1, 1]} : vector<4x64xf32> to vector<1x64xf32>
    %84 = vector.broadcast %82 : vector<4x1xf32> to vector<4x64xf32>
    %85 = vector.broadcast %83 : vector<1x64xf32> to vector<4x64xf32>
    %86 = arith.mulf %84, %85 : vector<4x64xf32>
    %87 = arith.addf %81, %86 : vector<4x64xf32>
    %c0_16 = arith.constant 0 : index
    %c4 = arith.constant 4 : index
    %c1_17 = arith.constant 1 : index
    %c0_18 = arith.constant 0 : index
    %88 = vector.load %arg1[%c0_16, %c4, %c1_17, %c0_18] : memref<1x16x9x9xf32, #tpu.memory_space<vmem>>, vector<1x4x8x8xf32>
    %89 = vector.shape_cast %88 : vector<1x4x8x8xf32> to vector<4x8x8xf32>
    %90 = vector.shape_cast %89 : vector<4x8x8xf32> to vector<4x64xf32>
    %c3 = arith.constant 3 : index
    %c0_19 = arith.constant 0 : index
    %c0_20 = arith.constant 0 : index
    %91 = vector.load %arg2[%c3, %c0_19, %c0_20] : memref<9x4x4xf32, #tpu.memory_space<vmem>>, vector<1x4x4xf32>
    %92 = vector.shape_cast %91 : vector<1x4x4xf32> to vector<4x4xf32>
    %93 = vector.extract_strided_slice %92 {offsets = [0, 0], sizes = [4, 1], strides = [1, 1]} : vector<4x4xf32> to vector<4x1xf32>
    %94 = vector.extract_strided_slice %90 {offsets = [0, 0], sizes = [1, 64], strides = [1, 1]} : vector<4x64xf32> to vector<1x64xf32>
    %95 = vector.broadcast %93 : vector<4x1xf32> to vector<4x64xf32>
    %96 = vector.broadcast %94 : vector<1x64xf32> to vector<4x64xf32>
    %97 = arith.mulf %95, %96 : vector<4x64xf32>
    %98 = arith.addf %87, %97 : vector<4x64xf32>
    %99 = vector.extract_strided_slice %92 {offsets = [0, 1], sizes = [4, 1], strides = [1, 1]} : vector<4x4xf32> to vector<4x1xf32>
    %100 = vector.extract_strided_slice %90 {offsets = [1, 0], sizes = [1, 64], strides = [1, 1]} : vector<4x64xf32> to vector<1x64xf32>
    %101 = vector.broadcast %99 : vector<4x1xf32> to vector<4x64xf32>
    %102 = vector.broadcast %100 : vector<1x64xf32> to vector<4x64xf32>
    %103 = arith.mulf %101, %102 : vector<4x64xf32>
    %104 = arith.addf %98, %103 : vector<4x64xf32>
    %105 = vector.extract_strided_slice %92 {offsets = [0, 2], sizes = [4, 1], strides = [1, 1]} : vector<4x4xf32> to vector<4x1xf32>
    %106 = vector.extract_strided_slice %90 {offsets = [2, 0], sizes = [1, 64], strides = [1, 1]} : vector<4x64xf32> to vector<1x64xf32>
    %107 = vector.broadcast %105 : vector<4x1xf32> to vector<4x64xf32>
    %108 = vector.broadcast %106 : vector<1x64xf32> to vector<4x64xf32>
    %109 = arith.mulf %107, %108 : vector<4x64xf32>
    %110 = arith.addf %104, %109 : vector<4x64xf32>
    %111 = vector.extract_strided_slice %92 {offsets = [0, 3], sizes = [4, 1], strides = [1, 1]} : vector<4x4xf32> to vector<4x1xf32>
    %112 = vector.extract_strided_slice %90 {offsets = [3, 0], sizes = [1, 64], strides = [1, 1]} : vector<4x64xf32> to vector<1x64xf32>
    %113 = vector.broadcast %111 : vector<4x1xf32> to vector<4x64xf32>
    %114 = vector.broadcast %112 : vector<1x64xf32> to vector<4x64xf32>
    %115 = arith.mulf %113, %114 : vector<4x64xf32>
    %116 = arith.addf %110, %115 : vector<4x64xf32>
    %c0_21 = arith.constant 0 : index
    %c0_22 = arith.constant 0 : index
    %c1_23 = arith.constant 1 : index
    %c1_24 = arith.constant 1 : index
    %117 = vector.load %arg1[%c0_21, %c0_22, %c1_23, %c1_24] : memref<1x16x9x9xf32, #tpu.memory_space<vmem>>, vector<1x4x8x8xf32>
    %118 = vector.shape_cast %117 : vector<1x4x8x8xf32> to vector<4x8x8xf32>
    %119 = vector.shape_cast %118 : vector<4x8x8xf32> to vector<4x64xf32>
    %c4_25 = arith.constant 4 : index
    %c0_26 = arith.constant 0 : index
    %c0_27 = arith.constant 0 : index
    %120 = vector.load %arg2[%c4_25, %c0_26, %c0_27] : memref<9x4x4xf32, #tpu.memory_space<vmem>>, vector<1x4x4xf32>
    %121 = vector.shape_cast %120 : vector<1x4x4xf32> to vector<4x4xf32>
    %122 = vector.extract_strided_slice %121 {offsets = [0, 0], sizes = [4, 1], strides = [1, 1]} : vector<4x4xf32> to vector<4x1xf32>
    %123 = vector.extract_strided_slice %119 {offsets = [0, 0], sizes = [1, 64], strides = [1, 1]} : vector<4x64xf32> to vector<1x64xf32>
    %124 = vector.broadcast %122 : vector<4x1xf32> to vector<4x64xf32>
    %125 = vector.broadcast %123 : vector<1x64xf32> to vector<4x64xf32>
    %126 = arith.mulf %124, %125 : vector<4x64xf32>
    %127 = arith.addf %116, %126 : vector<4x64xf32>
    %128 = vector.extract_strided_slice %121 {offsets = [0, 1], sizes = [4, 1], strides = [1, 1]} : vector<4x4xf32> to vector<4x1xf32>
    %129 = vector.extract_strided_slice %119 {offsets = [1, 0], sizes = [1, 64], strides = [1, 1]} : vector<4x64xf32> to vector<1x64xf32>
    %130 = vector.broadcast %128 : vector<4x1xf32> to vector<4x64xf32>
    %131 = vector.broadcast %129 : vector<1x64xf32> to vector<4x64xf32>
    %132 = arith.mulf %130, %131 : vector<4x64xf32>
    %133 = arith.addf %127, %132 : vector<4x64xf32>
    %134 = vector.extract_strided_slice %121 {offsets = [0, 2], sizes = [4, 1], strides = [1, 1]} : vector<4x4xf32> to vector<4x1xf32>
    %135 = vector.extract_strided_slice %119 {offsets = [2, 0], sizes = [1, 64], strides = [1, 1]} : vector<4x64xf32> to vector<1x64xf32>
    %136 = vector.broadcast %134 : vector<4x1xf32> to vector<4x64xf32>
    %137 = vector.broadcast %135 : vector<1x64xf32> to vector<4x64xf32>
    %138 = arith.mulf %136, %137 : vector<4x64xf32>
    %139 = arith.addf %133, %138 : vector<4x64xf32>
    %140 = vector.extract_strided_slice %121 {offsets = [0, 3], sizes = [4, 1], strides = [1, 1]} : vector<4x4xf32> to vector<4x1xf32>
    %141 = vector.extract_strided_slice %119 {offsets = [3, 0], sizes = [1, 64], strides = [1, 1]} : vector<4x64xf32> to vector<1x64xf32>
    %142 = vector.broadcast %140 : vector<4x1xf32> to vector<4x64xf32>
    %143 = vector.broadcast %141 : vector<1x64xf32> to vector<4x64xf32>
    %144 = arith.mulf %142, %143 : vector<4x64xf32>
    %145 = arith.addf %139, %144 : vector<4x64xf32>
    %c0_28 = arith.constant 0 : index
    %c4_29 = arith.constant 4 : index
    %c1_30 = arith.constant 1 : index
    %c1_31 = arith.constant 1 : index
    %146 = vector.load %arg1[%c0_28, %c4_29, %c1_30, %c1_31] : memref<1x16x9x9xf32, #tpu.memory_space<vmem>>, vector<1x4x8x8xf32>
    %147 = vector.shape_cast %146 : vector<1x4x8x8xf32> to vector<4x8x8xf32>
    %148 = vector.shape_cast %147 : vector<4x8x8xf32> to vector<4x64xf32>
    %c5 = arith.constant 5 : index
    %c0_32 = arith.constant 0 : index
    %c0_33 = arith.constant 0 : index
    %149 = vector.load %arg2[%c5, %c0_32, %c0_33] : memref<9x4x4xf32, #tpu.memory_space<vmem>>, vector<1x4x4xf32>
    %150 = vector.shape_cast %149 : vector<1x4x4xf32> to vector<4x4xf32>
    %151 = vector.extract_strided_slice %150 {offsets = [0, 0], sizes = [4, 1], strides = [1, 1]} : vector<4x4xf32> to vector<4x1xf32>
    %152 = vector.extract_strided_slice %148 {offsets = [0, 0], sizes = [1, 64], strides = [1, 1]} : vector<4x64xf32> to vector<1x64xf32>
    %153 = vector.broadcast %151 : vector<4x1xf32> to vector<4x64xf32>
    %154 = vector.broadcast %152 : vector<1x64xf32> to vector<4x64xf32>
    %155 = arith.mulf %153, %154 : vector<4x64xf32>
    %156 = arith.addf %145, %155 : vector<4x64xf32>
    %157 = vector.extract_strided_slice %150 {offsets = [0, 1], sizes = [4, 1], strides = [1, 1]} : vector<4x4xf32> to vector<4x1xf32>
    %158 = vector.extract_strided_slice %148 {offsets = [1, 0], sizes = [1, 64], strides = [1, 1]} : vector<4x64xf32> to vector<1x64xf32>
    %159 = vector.broadcast %157 : vector<4x1xf32> to vector<4x64xf32>
    %160 = vector.broadcast %158 : vector<1x64xf32> to vector<4x64xf32>
    %161 = arith.mulf %159, %160 : vector<4x64xf32>
    %162 = arith.addf %156, %161 : vector<4x64xf32>
    %163 = vector.extract_strided_slice %150 {offsets = [0, 2], sizes = [4, 1], strides = [1, 1]} : vector<4x4xf32> to vector<4x1xf32>
    %164 = vector.extract_strided_slice %148 {offsets = [2, 0], sizes = [1, 64], strides = [1, 1]} : vector<4x64xf32> to vector<1x64xf32>
    %165 = vector.broadcast %163 : vector<4x1xf32> to vector<4x64xf32>
    %166 = vector.broadcast %164 : vector<1x64xf32> to vector<4x64xf32>
    %167 = arith.mulf %165, %166 : vector<4x64xf32>
    %168 = arith.addf %162, %167 : vector<4x64xf32>
    %169 = vector.extract_strided_slice %150 {offsets = [0, 3], sizes = [4, 1], strides = [1, 1]} : vector<4x4xf32> to vector<4x1xf32>
    %170 = vector.extract_strided_slice %148 {offsets = [3, 0], sizes = [1, 64], strides = [1, 1]} : vector<4x64xf32> to vector<1x64xf32>
    %171 = vector.broadcast %169 : vector<4x1xf32> to vector<4x64xf32>
    %172 = vector.broadcast %170 : vector<1x64xf32> to vector<4x64xf32>
    %173 = arith.mulf %171, %172 : vector<4x64xf32>
    %174 = arith.addf %168, %173 : vector<4x64xf32>
    %c0_34 = arith.constant 0 : index
    %c12_35 = arith.constant 12 : index
    %c1_36 = arith.constant 1 : index
    %c0_37 = arith.constant 0 : index
    %175 = vector.load %arg1[%c0_34, %c12_35, %c1_36, %c0_37] : memref<1x16x9x9xf32, #tpu.memory_space<vmem>>, vector<1x4x8x8xf32>
    %176 = vector.shape_cast %175 : vector<1x4x8x8xf32> to vector<4x8x8xf32>
    %177 = vector.shape_cast %176 : vector<4x8x8xf32> to vector<4x64xf32>
    %c6 = arith.constant 6 : index
    %c0_38 = arith.constant 0 : index
    %c0_39 = arith.constant 0 : index
    %178 = vector.load %arg2[%c6, %c0_38, %c0_39] : memref<9x4x4xf32, #tpu.memory_space<vmem>>, vector<1x4x4xf32>
    %179 = vector.shape_cast %178 : vector<1x4x4xf32> to vector<4x4xf32>
    %180 = vector.extract_strided_slice %179 {offsets = [0, 0], sizes = [4, 1], strides = [1, 1]} : vector<4x4xf32> to vector<4x1xf32>
    %181 = vector.extract_strided_slice %177 {offsets = [0, 0], sizes = [1, 64], strides = [1, 1]} : vector<4x64xf32> to vector<1x64xf32>
    %182 = vector.broadcast %180 : vector<4x1xf32> to vector<4x64xf32>
    %183 = vector.broadcast %181 : vector<1x64xf32> to vector<4x64xf32>
    %184 = arith.mulf %182, %183 : vector<4x64xf32>
    %185 = arith.addf %174, %184 : vector<4x64xf32>
    %186 = vector.extract_strided_slice %179 {offsets = [0, 1], sizes = [4, 1], strides = [1, 1]} : vector<4x4xf32> to vector<4x1xf32>
    %187 = vector.extract_strided_slice %177 {offsets = [1, 0], sizes = [1, 64], strides = [1, 1]} : vector<4x64xf32> to vector<1x64xf32>
    %188 = vector.broadcast %186 : vector<4x1xf32> to vector<4x64xf32>
    %189 = vector.broadcast %187 : vector<1x64xf32> to vector<4x64xf32>
    %190 = arith.mulf %188, %189 : vector<4x64xf32>
    %191 = arith.addf %185, %190 : vector<4x64xf32>
    %192 = vector.extract_strided_slice %179 {offsets = [0, 2], sizes = [4, 1], strides = [1, 1]} : vector<4x4xf32> to vector<4x1xf32>
    %193 = vector.extract_strided_slice %177 {offsets = [2, 0], sizes = [1, 64], strides = [1, 1]} : vector<4x64xf32> to vector<1x64xf32>
    %194 = vector.broadcast %192 : vector<4x1xf32> to vector<4x64xf32>
    %195 = vector.broadcast %193 : vector<1x64xf32> to vector<4x64xf32>
    %196 = arith.mulf %194, %195 : vector<4x64xf32>
    %197 = arith.addf %191, %196 : vector<4x64xf32>
    %198 = vector.extract_strided_slice %179 {offsets = [0, 3], sizes = [4, 1], strides = [1, 1]} : vector<4x4xf32> to vector<4x1xf32>
    %199 = vector.extract_strided_slice %177 {offsets = [3, 0], sizes = [1, 64], strides = [1, 1]} : vector<4x64xf32> to vector<1x64xf32>
    %200 = vector.broadcast %198 : vector<4x1xf32> to vector<4x64xf32>
    %201 = vector.broadcast %199 : vector<1x64xf32> to vector<4x64xf32>
    %202 = arith.mulf %200, %201 : vector<4x64xf32>
    %203 = arith.addf %197, %202 : vector<4x64xf32>
    %c0_40 = arith.constant 0 : index
    %c8_41 = arith.constant 8 : index
    %c1_42 = arith.constant 1 : index
    %c1_43 = arith.constant 1 : index
    %204 = vector.load %arg1[%c0_40, %c8_41, %c1_42, %c1_43] : memref<1x16x9x9xf32, #tpu.memory_space<vmem>>, vector<1x4x8x8xf32>
    %205 = vector.shape_cast %204 : vector<1x4x8x8xf32> to vector<4x8x8xf32>
    %206 = vector.shape_cast %205 : vector<4x8x8xf32> to vector<4x64xf32>
    %c7 = arith.constant 7 : index
    %c0_44 = arith.constant 0 : index
    %c0_45 = arith.constant 0 : index
    %207 = vector.load %arg2[%c7, %c0_44, %c0_45] : memref<9x4x4xf32, #tpu.memory_space<vmem>>, vector<1x4x4xf32>
    %208 = vector.shape_cast %207 : vector<1x4x4xf32> to vector<4x4xf32>
    %209 = vector.extract_strided_slice %208 {offsets = [0, 0], sizes = [4, 1], strides = [1, 1]} : vector<4x4xf32> to vector<4x1xf32>
    %210 = vector.extract_strided_slice %206 {offsets = [0, 0], sizes = [1, 64], strides = [1, 1]} : vector<4x64xf32> to vector<1x64xf32>
    %211 = vector.broadcast %209 : vector<4x1xf32> to vector<4x64xf32>
    %212 = vector.broadcast %210 : vector<1x64xf32> to vector<4x64xf32>
    %213 = arith.mulf %211, %212 : vector<4x64xf32>
    %214 = arith.addf %203, %213 : vector<4x64xf32>
    %215 = vector.extract_strided_slice %208 {offsets = [0, 1], sizes = [4, 1], strides = [1, 1]} : vector<4x4xf32> to vector<4x1xf32>
    %216 = vector.extract_strided_slice %206 {offsets = [1, 0], sizes = [1, 64], strides = [1, 1]} : vector<4x64xf32> to vector<1x64xf32>
    %217 = vector.broadcast %215 : vector<4x1xf32> to vector<4x64xf32>
    %218 = vector.broadcast %216 : vector<1x64xf32> to vector<4x64xf32>
    %219 = arith.mulf %217, %218 : vector<4x64xf32>
    %220 = arith.addf %214, %219 : vector<4x64xf32>
    %221 = vector.extract_strided_slice %208 {offsets = [0, 2], sizes = [4, 1], strides = [1, 1]} : vector<4x4xf32> to vector<4x1xf32>
    %222 = vector.extract_strided_slice %206 {offsets = [2, 0], sizes = [1, 64], strides = [1, 1]} : vector<4x64xf32> to vector<1x64xf32>
    %223 = vector.broadcast %221 : vector<4x1xf32> to vector<4x64xf32>
    %224 = vector.broadcast %222 : vector<1x64xf32> to vector<4x64xf32>
    %225 = arith.mulf %223, %224 : vector<4x64xf32>
    %226 = arith.addf %220, %225 : vector<4x64xf32>
    %227 = vector.extract_strided_slice %208 {offsets = [0, 3], sizes = [4, 1], strides = [1, 1]} : vector<4x4xf32> to vector<4x1xf32>
    %228 = vector.extract_strided_slice %206 {offsets = [3, 0], sizes = [1, 64], strides = [1, 1]} : vector<4x64xf32> to vector<1x64xf32>
    %229 = vector.broadcast %227 : vector<4x1xf32> to vector<4x64xf32>
    %230 = vector.broadcast %228 : vector<1x64xf32> to vector<4x64xf32>
    %231 = arith.mulf %229, %230 : vector<4x64xf32>
    %232 = arith.addf %226, %231 : vector<4x64xf32>
    %c0_46 = arith.constant 0 : index
    %c12_47 = arith.constant 12 : index
    %c1_48 = arith.constant 1 : index
    %c1_49 = arith.constant 1 : index
    %233 = vector.load %arg1[%c0_46, %c12_47, %c1_48, %c1_49] : memref<1x16x9x9xf32, #tpu.memory_space<vmem>>, vector<1x4x8x8xf32>
    %234 = vector.shape_cast %233 : vector<1x4x8x8xf32> to vector<4x8x8xf32>
    %235 = vector.shape_cast %234 : vector<4x8x8xf32> to vector<4x64xf32>
    %c8_50 = arith.constant 8 : index
    %c0_51 = arith.constant 0 : index
    %c0_52 = arith.constant 0 : index
    %236 = vector.load %arg2[%c8_50, %c0_51, %c0_52] : memref<9x4x4xf32, #tpu.memory_space<vmem>>, vector<1x4x4xf32>
    %237 = vector.shape_cast %236 : vector<1x4x4xf32> to vector<4x4xf32>
    %238 = vector.extract_strided_slice %237 {offsets = [0, 0], sizes = [4, 1], strides = [1, 1]} : vector<4x4xf32> to vector<4x1xf32>
    %239 = vector.extract_strided_slice %235 {offsets = [0, 0], sizes = [1, 64], strides = [1, 1]} : vector<4x64xf32> to vector<1x64xf32>
    %240 = vector.broadcast %238 : vector<4x1xf32> to vector<4x64xf32>
    %241 = vector.broadcast %239 : vector<1x64xf32> to vector<4x64xf32>
    %242 = arith.mulf %240, %241 : vector<4x64xf32>
    %243 = arith.addf %232, %242 : vector<4x64xf32>
    %244 = vector.extract_strided_slice %237 {offsets = [0, 1], sizes = [4, 1], strides = [1, 1]} : vector<4x4xf32> to vector<4x1xf32>
    %245 = vector.extract_strided_slice %235 {offsets = [1, 0], sizes = [1, 64], strides = [1, 1]} : vector<4x64xf32> to vector<1x64xf32>
    %246 = vector.broadcast %244 : vector<4x1xf32> to vector<4x64xf32>
    %247 = vector.broadcast %245 : vector<1x64xf32> to vector<4x64xf32>
    %248 = arith.mulf %246, %247 : vector<4x64xf32>
    %249 = arith.addf %243, %248 : vector<4x64xf32>
    %250 = vector.extract_strided_slice %237 {offsets = [0, 2], sizes = [4, 1], strides = [1, 1]} : vector<4x4xf32> to vector<4x1xf32>
    %251 = vector.extract_strided_slice %235 {offsets = [2, 0], sizes = [1, 64], strides = [1, 1]} : vector<4x64xf32> to vector<1x64xf32>
    %252 = vector.broadcast %250 : vector<4x1xf32> to vector<4x64xf32>
    %253 = vector.broadcast %251 : vector<1x64xf32> to vector<4x64xf32>
    %254 = arith.mulf %252, %253 : vector<4x64xf32>
    %255 = arith.addf %249, %254 : vector<4x64xf32>
    %256 = vector.extract_strided_slice %237 {offsets = [0, 3], sizes = [4, 1], strides = [1, 1]} : vector<4x4xf32> to vector<4x1xf32>
    %257 = vector.extract_strided_slice %235 {offsets = [3, 0], sizes = [1, 64], strides = [1, 1]} : vector<4x64xf32> to vector<1x64xf32>
    %258 = vector.broadcast %256 : vector<4x1xf32> to vector<4x64xf32>
    %259 = vector.broadcast %257 : vector<1x64xf32> to vector<4x64xf32>
    %260 = arith.mulf %258, %259 : vector<4x64xf32>
    %261 = arith.addf %255, %260 : vector<4x64xf32>
    %c0_53 = arith.constant 0 : index
    %c0_54 = arith.constant 0 : index
    %262 = vector.load %arg3[%c0_53, %c0_54] : memref<4x1xf32, #tpu.memory_space<vmem>>, vector<4x1xf32>
    %263 = vector.broadcast %262 : vector<4x1xf32> to vector<4x64xf32>
    %264 = arith.addf %261, %263 : vector<4x64xf32>
    %c0_55 = arith.constant 0 : index
    %c0_56 = arith.constant 0 : index
    %c0_57 = arith.constant 0 : index
    %265 = vector.load %arg4[%c0_55, %c0_56, %c0_57] : memref<1x4x64xf32, #tpu.memory_space<vmem>>, vector<1x4x64xf32>
    %266 = vector.shape_cast %265 : vector<1x4x64xf32> to vector<4x64xf32>
    %267 = vector.shape_cast %264 : vector<4x64xf32> to vector<1x4x64xf32>
    tpu.vector_store %arg4[%c0_55, %c0_56, %c0_57], %267 {strides = array<i32>} : memref<1x4x64xf32, #tpu.memory_space<vmem>>, vector<1x4x64xf32>,
    return
  }
  func.func @transform_0(%arg0: i32) -> (i32, i32, i32, i32) {
    %c0_i32 = arith.constant 0 : i32
    %c0_i32_0 = arith.constant 0 : i32
    %c0_i32_1 = arith.constant 0 : i32
    %c0_i32_2 = arith.constant 0 : i32
    return %arg0, %c0_i32, %c0_i32_0, %c0_i32_1 : i32, i32, i32, i32
  }
  func.func @transform_1(%arg0: i32) -> (i32, i32, i32) {
    %c0_i32 = arith.constant 0 : i32
    %c0_i32_0 = arith.constant 0 : i32
    %c0_i32_1 = arith.constant 0 : i32
    %c0_i32_2 = arith.constant 0 : i32
    return %c0_i32, %c0_i32_0, %c0_i32_1 : i32, i32, i32
  }
  func.func @transform_2(%arg0: i32) -> (i32, i32) {
    %c0_i32 = arith.constant 0 : i32
    %c0_i32_0 = arith.constant 0 : i32
    %c0_i32_1 = arith.constant 0 : i32
    return %c0_i32, %c0_i32_0 : i32, i32
  }
  func.func @transform_3(%arg0: i32) -> (i32, i32, i32) {
    %c0_i32 = arith.constant 0 : i32
    %c0_i32_0 = arith.constant 0 : i32
    %c0_i32_1 = arith.constant 0 : i32
    return %arg0, %c0_i32, %c0_i32_0 : i32, i32, i32
  }
}

</mosaic_0001>

<llo_original>
// kernel: tpu_custom_call.1
$region0: #{tpu_custom_call.1}
  #allocation0 [shape = 'u32[]', space=smem, size = 0x4, offset = 0x4, fixed_abs, tag = 'smem constant byte address 0x4 - core index']
  #allocation1 [shape = 'u32[144,128]{1,0:T(1,128)}', space=vmem, size = 0x12000, scoped, tag = 'internal scratch']
  %s0 = inlined_call_operand.vmem [shape: f32[2,16,9,9], index: 0, kind: input, shape index: {}]
  %s1 = inlined_call_operand.vmem [shape: f32[9,4,4], index: 1, kind: input, shape index: {}]
  %s2 = inlined_call_operand.vmem [shape: f32[4,1], index: 2, kind: input, shape index: {}]
  %s3 = inlined_call_operand.hbm [shape: f32[2,4,64], index: 3, kind: output, shape index: {}]
  %s4 = sld [smem:[#allocation0]]
  $region45: #{tpu_custom_call.1} parent=0
    _
  %s6 = ssub.s32 1, %s4
  %s7 = scalar_select 0, %s6, %s4
  $region1: #{tpu_custom_call.1} parent=0
    #allocation2 [shape = 'u8[4096]{0}', space=vmem, size = 0x1000, scoped, tag = 'output window, operand 0']
    #allocation3 [shape = 's32[2]{0}', space=sflag, size = 0x8, scoped, tag = 'scoped memory for tpu_custom_call.1']
    %8 = vsyncpa [#allocation3], 0
    %s9 = scalar_lea.sflag [#allocation3], 1
    %10 = vsyncpa %s9, 0
    loop: start=0, step=1, limit=4
    $region2: #{tpu_custom_call.1} parent=1 // loop_pre_header
      _
    $region3: #{tpu_custom_call.1} parent=1 // loop_header
      %s12 = sphi 0, %s16
      %p13 = scmp.ge.s32.totalorder %s12, 4
      %s22 = sphi 0, %s24
      %s25 = sphi 0, %s22
      %s26 = sphi 0, %s25
      %s42 = sphi 0, %s26
      %s46 = sphi 0, %s46
      %s48 = sphi 0, %s46
      %s49 = sphi 0, %s48
      %s63 = sphi 0, %s49
      %s67 = sphi 0, %s67
      %s69 = sphi 0, %s67
      %s70 = sphi 0, %s69
      %s84 = sphi 0, %s70
      %s90 = sphi 0, %s92
      %s93 = sphi 0, %s90
      %s94 = sphi 0, %s93
      %s110 = sphi 0, %s94
    $region4: #{tpu_custom_call.1} parent=1 // loop_header_branch
      %15 = sbr.rel (%p13) target = $region8
    $region5: #{tpu_custom_call.1} parent=1 // loop_body
      %s17 = ssub.s32 %s12, 1
      %s18 = ssub.s32 %s12, 2
      %s19 = sadd.s32 %s12, 1
      %s20 = ssub.s32 %s12, %s19
      %p21 = scmp.eq.s32.totalorder %s20, 0
      %s23 = sadd.s32 %s22, 1
      %s24 = scalar_select %p21, %s22, %s23
      %p27 = pneg %p21
      %p28 = scmp.eq.s32.totalorder %s12, 1
      %p29 = por %p27, %p28
      %p30 = scmp.ne.s32.totalorder %s22, %s25
      %p31 = scmp.eq.s32.totalorder %s12, 0
      %p32 = por %p30, %p31
      %p33 = scmp.ne.s32.totalorder %s22, %s25
      %p34 = scmp.eq.s32.totalorder %s17, 1
      %p35 = por %p33, %p34
      %p36 = scmp.ne.s32.totalorder %s25, %s26
      %p37 = scmp.eq.s32.totalorder %s17, 0
      %p38 = por %p36, %p37
      %p39 = scmp.ne.s32.totalorder %s25, %s26
      %p40 = scmp.eq.s32.totalorder %s18, 1
      %p41 = por %p39, %p40
      %p43 = scmp.ne.s32.totalorder %s26, %s42
      %p44 = scmp.eq.s32.totalorder %s18, 0
      %p45 = por %p43, %p44
      %s47 = sadd.s32 %s46, 1
      %p50 = scmp.eq.s32.totalorder %s12, 1
      %p51 = scmp.ne.s32.totalorder %s46, %s48
      %p52 = scmp.eq.s32.totalorder %s12, 0
      %p53 = por %p51, %p52
      %p54 = scmp.ne.s32.totalorder %s46, %s48
      %p55 = scmp.eq.s32.totalorder %s17, 1
      %p56 = por %p54, %p55
      %p57 = scmp.ne.s32.totalorder %s48, %s49
      %p58 = scmp.eq.s32.totalorder %s17, 0
      %p59 = por %p57, %p58
      %p60 = scmp.ne.s32.totalorder %s48, %s49
      %p61 = scmp.eq.s32.totalorder %s18, 1
      %p62 = por %p60, %p61
      %p64 = scmp.ne.s32.totalorder %s49, %s63
      %p65 = scmp.eq.s32.totalorder %s18, 0
      %p66 = por %p64, %p65
      %s68 = sadd.s32 %s67, 1
      %p71 = scmp.eq.s32.totalorder %s12, 1
      %p72 = scmp.ne.s32.totalorder %s67, %s69
      %p73 = scmp.eq.s32.totalorder %s12, 0
      %p74 = por %p72, %p73
      %p75 = scmp.ne.s32.totalorder %s67, %s69
      %p76 = scmp.eq.s32.totalorder %s17, 1
      %p77 = por %p75, %p76
      %p78 = scmp.ne.s32.totalorder %s69, %s70
      %p79 = scmp.eq.s32.totalorder %s17, 0
      %p80 = por %p78, %p79
      %p81 = scmp.ne.s32.totalorder %s69, %s70
      %p82 = scmp.eq.s32.totalorder %s18, 1
      %p83 = por %p81, %p82
      %p85 = scmp.ne.s32.totalorder %s70, %s84
      %p86 = scmp.eq.s32.totalorder %s18, 0
      %p87 = por %p85, %p86
      %s88 = ssub.s32 %s12, %s19
      %p89 = scmp.eq.s32.totalorder %s88, 0
      %s91 = sadd.s32 %s90, 1
      %s92 = scalar_select %p89, %s90, %s91
      %p95 = pneg %p89
      %p96 = scmp.eq.s32.totalorder %s12, 1
      %p97 = por %p95, %p96
      %p98 = scmp.ne.s32.totalorder %s90, %s93
      %p99 = scmp.eq.s32.totalorder %s12, 0
      %p100 = por %p98, %p99
      %p101 = scmp.ne.s32.totalorder %s90, %s93
      %p102 = scmp.eq.s32.totalorder %s17, 1
      %p103 = por %p101, %p102
      %p104 = scmp.ne.s32.totalorder %s93, %s94
      %p105 = scmp.eq.s32.totalorder %s17, 0
      %p106 = por %p104, %p105
      %p107 = scmp.ne.s32.totalorder %s93, %s94
      %p108 = scmp.eq.s32.totalorder %s18, 1
      %p109 = por %p107, %p108
      %p111 = scmp.ne.s32.totalorder %s94, %s110
      %p112 = scmp.eq.s32.totalorder %s18, 0
      %p113 = por %p111, %p112
      %p114 = scmp.le.s32.totalorder 1, %s12
      %p115 = scmp.lt.s32.totalorder %s12, 3
      %p116 = pnand %p114, %p115
      %p117 = pneg %p116
      // Predicated region
      $region9: #{tpu_custom_call.1} parent=5 // pred_check
        _
      $region10: #{tpu_custom_call.1} parent=5 // pred_check_branch
        %119 = sbr.rel (%p116) target = $region12
      $region11: #{tpu_custom_call.1} parent=5 // pred_region
        %s120 = ssub.s32 %s12, 1
        // Predicated region
        $region13: #{tpu_custom_call.1} parent=11 // pred_check
          %p121 = pneg %p59
        $region14: #{tpu_custom_call.1} parent=11 // pred_check_branch
          %123 = sbr.rel (%p121) target = $region16
        $region15: #{tpu_custom_call.1} parent=11 // pred_region
          _
        $region16: #{tpu_custom_call.1} parent=11 // pred_fallthru
          _
        // Predicated region
        $region17: #{tpu_custom_call.1} parent=11 // pred_check
          %p124 = pneg %p80
        $region18: #{tpu_custom_call.1} parent=11 // pred_check_branch
          %126 = sbr.rel (%p124) target = $region20
        $region19: #{tpu_custom_call.1} parent=11 // pred_region
          _
        $region20: #{tpu_custom_call.1} parent=11 // pred_fallthru
          _
      $region12: #{tpu_custom_call.1} parent=5 // pred_fallthru
        _
      %p127 = scmp.lt.s32.totalorder %s12, 2
      // Predicated region
      $region21: #{tpu_custom_call.1} parent=5 // pred_check
        %p128 = pneg %p127
      $region22: #{tpu_custom_call.1} parent=5 // pred_check_branch
        %130 = sbr.rel (%p128) target = $region24
      $region23: #{tpu_custom_call.1} parent=5 // pred_region
        // Predicated region
        $region25: #{tpu_custom_call.1} parent=23 // pred_check
          %p131 = pneg %p32
        $region26: #{tpu_custom_call.1} parent=23 // pred_check_branch
          %133 = sbr.rel (%p131) target = $region28
        $region27: #{tpu_custom_call.1} parent=23 // pred_region
          %p134 = scmp.lt.s32.totalorder %s12, 1
          %s135 = scalar_select %p134, %s12, 1
          %s136 = smul.addr %s135, 32
          %s137 = smul.addr %s136, 8
          %s138 = scalar_lea.vmem %s0, %s137
        $region28: #{tpu_custom_call.1} parent=23 // pred_fallthru
          _
      $region24: #{tpu_custom_call.1} parent=5 // pred_fallthru
        _
      %p139 = scmp.le.s32.totalorder 1, %s12
      %p140 = scmp.lt.s32.totalorder %s12, 3
      %p141 = pnand %p139, %p140
      %p142 = pneg %p141
      // Predicated region
      $region29: #{tpu_custom_call.1} parent=5 // pred_check
        _
      $region30: #{tpu_custom_call.1} parent=5 // pred_check_branch
        %144 = sbr.rel (%p141) target = $region32
      $region31: #{tpu_custom_call.1} parent=5 // pred_region
        %s145 = ssub.s32 %s12, 1
        %p146 = scmp.lt.s32.totalorder %s17, 1
        %s147 = scalar_select %p146, %s17, 1
        %s148 = smul.addr %s147, 32
        %s149 = smul.addr %s148, 8
        %s150 = scalar_lea.vmem %s0, %s149
        %p151 = pneg %p38
        %p152 = pneg %p35
        %p153 = pneg %p59
        %p154 = pneg %p56
        %p155 = pneg %p80
        %p156 = pneg %p77
        %p157 = pneg %p106
        %p158 = pneg %p103
        %s159 = sand.u32 %s93, 1
        %s160 = scalar_lea.sflag [#allocation3], %s159
        %s161 = sand.u32 %s93, 1
        %s162 = smul.addr %s161, 4
        %s163 = scalar_lea.vmem [#allocation2], %s162
        %p164 = scmp.lt.s32.totalorder %s17, 1
        %s165 = scalar_select %p164, %s17, 1
        %s166 = smul.addr %s165, 32
        %s167 = smul.addr %s166, 8
        %s168 = scalar_lea.vmem %s0, %s167
        %s169 = scalar_lea.vmem %s168, 192
        %v170 = vld [vmem:[%s169] sm:$0xff]
        %v171 = vld [vmem:[%s169 + $0x10] sm:$0xff]
        %v172 = vld [vmem:[%s169 + $0x20] sm:$0xff]
        %v173 = vld [vmem:[%s169 + $0x30] sm:$0xff]
        %v174 = vcombine.low %v170, %v172
        %v175 = vcombine.high %v170, %v172
        %v177 = vunpack.c.l.s4 1983009808
        %v178 = vunpack.c.0.s8 %v177
        %v179 = vlaneseq
        %v180 = vshrl.u32 %v179, 7
        %v181 = vsub.s32 %v178, %v180
        %v182 = vrot.slane %v174, %v181
        %v184 = vunpack.c.l.s4 1983009808
        %v185 = vunpack.c.0.s8 %v184
        %v186 = vlaneseq
        %v187 = vshrl.u32 %v186, 7
        %v188 = vsub.s32 %v185, %v187
        %v189 = vrot.slane %v175, %v188
        %v190 = vcombine.low %v171, %v173
        %v191 = vcombine.high %v171, %v173
        %v193 = vunpack.c.l.s4 1983009808
        %v194 = vunpack.c.0.s8 %v193
        %v195 = vlaneseq
        %v196 = vshrl.u32 %v195, 7
        %v197 = vsub.s32 %v194, %v196
        %v198 = vrot.slane %v190, %v197
        %v200 = vunpack.c.l.s4 1983009808
        %v201 = vunpack.c.0.s8 %v200
        %v202 = vlaneseq
        %v203 = vshrl.u32 %v202, 7
        %v204 = vsub.s32 %v201, %v203
        %v205 = vrot.slane %v191, %v204
        %v206 = vcombine.low %v182, %v198
        %v207 = vcombine.high %v182, %v198
        %v209 = vunpack.c.l.s4 1934713408
        %v210 = vunpack.c.0.s8 %v209
        %v211 = vlaneseq
        %v212 = vshrl.u32 %v211, 7
        %v213 = vsub.s32 %v210, %v212
        %v214 = vrot.slane %v206, %v213
        %v216 = vunpack.c.l.s4 1934713408
        %v217 = vunpack.c.0.s8 %v216
        %v218 = vlaneseq
        %v219 = vshrl.u32 %v218, 7
        %v220 = vsub.s32 %v217, %v219
        %v221 = vrot.slane %v207, %v220
        %v222 = vcombine.low %v189, %v205
        %v223 = vcombine.high %v189, %v205
        %v225 = vunpack.c.l.s4 1934713408
        %v226 = vunpack.c.0.s8 %v225
        %v227 = vlaneseq
        %v228 = vshrl.u32 %v227, 7
        %v229 = vsub.s32 %v226, %v228
        %v230 = vrot.slane %v222, %v229
        %v232 = vunpack.c.l.s4 1934713408
        %v233 = vunpack.c.0.s8 %v232
        %v234 = vlaneseq
        %v235 = vshrl.u32 %v234, 7
        %v236 = vsub.s32 %v233, %v235
        %v237 = vrot.slane %v223, %v236
        %v238 = vcombine.high %v214, 0.0
        %v239 = vcombine.high %v221, 0.0
        %v240 = vcombine.high %v230, 0.0
        %v241 = vcombine.high %v237, 0.0
        %243 = vrot.lane.b32.xlu0 %v238, 8
        %v244 = vpop.permute.xlu0 %243
        %247 = vrot.lane.b32.xlu0 %v221, 16
        %v248 = vpop.permute.xlu0 %247
        %251 = vrot.lane.b32.xlu0 %v239, 24
        %v252 = vpop.permute.xlu0 %251
        %255 = vrot.lane.b32.xlu0 %v230, 32
        %v256 = vpop.permute.xlu0 %255
        %259 = vrot.lane.b32.xlu0 %v240, 40
        %v260 = vpop.permute.xlu0 %259
        %263 = vrot.lane.b32.xlu0 %v237, 48
        %v264 = vpop.permute.xlu0 %263
        %267 = vrot.lane.b32.xlu0 %v241, 56
        %v268 = vpop.permute.xlu0 %267
        %vm270 = vcmask 64512
        %v271 = vsel %vm270, %v214, %v244
        %vm272 = vcmask 130048
        %v273 = vsel %vm272, %v271, %v248
        %vm274 = vcmask 195584
        %v275 = vsel %vm274, %v273, %v252
        %vm276 = vcmask 261120
        %v277 = vsel %vm276, %v275, %v256
        %vm278 = vcmask 326656
        %v279 = vsel %vm278, %v277, %v260
        %vm280 = vcmask 392192
        %v281 = vsel %vm280, %v279, %v264
        %vm282 = vcmask 457728
        %v283 = vsel %vm282, %v281, %v268
        %v284 = vld [vmem:[%s1] sm:$0xf]
        %286 = vset.pattern.permute.xlu0 0
        %287 = vperm.xlu0 %286, %v284
        %v288 = vpop.permute.xlu0 %287
        %v290 = vlaneseq
        %v291 = vshrl.u32 %v290, 7
        %v292 = vsub.s32 0, %v291
        %v293 = vrot.slane %v283, %v292
        %v294 = vmul.f32 %v288, %v293
        %v295 = vadd.f32 %v294, 0.0
        %296 = vset.pattern.permute.xlu0 1
        %297 = vperm.xlu0 %296, %v284
        %v298 = vpop.permute.xlu0 %297
        %v300 = vlaneseq
        %v301 = vshrl.u32 %v300, 7
        %v302 = vsub.s32 1, %v301
        %v303 = vrot.slane %v283, %v302
        %v304 = vmul.f32 %v298, %v303
        %v305 = vadd.f32 %v295, %v304
        %306 = vset.pattern.permute.xlu0 2
        %307 = vperm.xlu0 %306, %v284
        %v308 = vpop.permute.xlu0 %307
        %v310 = vlaneseq
        %v311 = vshrl.u32 %v310, 7
        %v312 = vsub.s32 2, %v311
        %v313 = vrot.slane %v283, %v312
        %v314 = vmul.f32 %v308, %v313
        %v315 = vadd.f32 %v305, %v314
        %316 = vset.pattern.permute.xlu0 3
        %317 = vperm.xlu0 %316, %v284
        %v318 = vpop.permute.xlu0 %317
        %v320 = vlaneseq
        %v321 = vshrl.u32 %v320, 7
        %v322 = vsub.s32 3, %v321
        %v323 = vrot.slane %v283, %v322
        %v324 = vmul.f32 %v318, %v323
        %v325 = vadd.f32 %v315, %v324
        %s326 = scalar_lea.vmem %s168, 128
        %v327 = vld [vmem:[%s326] sm:$0xff]
        %v328 = vld [vmem:[%s326 + $0x10] sm:$0xff]
        %v329 = vld [vmem:[%s326 + $0x20] sm:$0xff]
        %v330 = vld [vmem:[%s326 + $0x30] sm:$0xff]
        %335 = vrot.lane.b32.xlu0 %v327, 127
        %v336 = vpop.permute.xlu0 %335
        %337 = vrot.lane.b32.xlu0 %v328, 127
        %v338 = vpop.permute.xlu0 %337
        %339 = vrot.lane.b32.xlu0 %v329, 127
        %v340 = vpop.permute.xlu0 %339
        %341 = vrot.lane.b32.xlu0 %v330, 127
        %v342 = vpop.permute.xlu0 %341
        %v347 = vcombine.low %v336, %v340
        %v348 = vcombine.high %v336, %v340
        %v350 = vunpack.c.l.s4 1983009808
        %v351 = vunpack.c.0.s8 %v350
        %v352 = vlaneseq
        %v353 = vshrl.u32 %v352, 7
        %v354 = vsub.s32 %v351, %v353
        %v355 = vrot.slane %v347, %v354
        %v357 = vunpack.c.l.s4 1983009808
        %v358 = vunpack.c.0.s8 %v357
        %v359 = vlaneseq
        %v360 = vshrl.u32 %v359, 7
        %v361 = vsub.s32 %v358, %v360
        %v362 = vrot.slane %v348, %v361
        %v363 = vcombine.low %v338, %v342
        %v364 = vcombine.high %v338, %v342
        %v366 = vunpack.c.l.s4 1983009808
        %v367 = vunpack.c.0.s8 %v366
        %v368 = vlaneseq
        %v369 = vshrl.u32 %v368, 7
        %v370 = vsub.s32 %v367, %v369
        %v371 = vrot.slane %v363, %v370
        %v373 = vunpack.c.l.s4 1983009808
        %v374 = vunpack.c.0.s8 %v373
        %v375 = vlaneseq
        %v376 = vshrl.u32 %v375, 7
        %v377 = vsub.s32 %v374, %v376
        %v378 = vrot.slane %v364, %v377
        %v379 = vcombine.low %v355, %v371
        %v380 = vcombine.high %v355, %v371
        %v382 = vunpack.c.l.s4 1934713408
        %v383 = vunpack.c.0.s8 %v382
        %v384 = vlaneseq
        %v385 = vshrl.u32 %v384, 7
        %v386 = vsub.s32 %v383, %v385
        %v387 = vrot.slane %v379, %v386
        %v389 = vunpack.c.l.s4 1934713408
        %v390 = vunpack.c.0.s8 %v389
        %v391 = vlaneseq
        %v392 = vshrl.u32 %v391, 7
        %v393 = vsub.s32 %v390, %v392
        %v394 = vrot.slane %v380, %v393
        %v395 = vcombine.low %v362, %v378
        %v396 = vcombine.high %v362, %v378
        %v398 = vunpack.c.l.s4 1934713408
        %v399 = vunpack.c.0.s8 %v398
        %v400 = vlaneseq
        %v401 = vshrl.u32 %v400, 7
        %v402 = vsub.s32 %v399, %v401
        %v403 = vrot.slane %v395, %v402
        %v405 = vunpack.c.l.s4 1934713408
        %v406 = vunpack.c.0.s8 %v405
        %v407 = vlaneseq
        %v408 = vshrl.u32 %v407, 7
        %v409 = vsub.s32 %v406, %v408
        %v410 = vrot.slane %v396, %v409
        %v411 = vcombine.high %v387, 0.0
        %v412 = vcombine.high %v394, 0.0
        %v413 = vcombine.high %v403, 0.0
        %v414 = vcombine.high %v410, 0.0
        %416 = vrot.lane.b32.xlu0 %v411, 8
        %v417 = vpop.permute.xlu0 %416
        %420 = vrot.lane.b32.xlu0 %v394, 16
        %v421 = vpop.permute.xlu0 %420
        %424 = vrot.lane.b32.xlu0 %v412, 24
        %v425 = vpop.permute.xlu0 %424
        %428 = vrot.lane.b32.xlu0 %v403, 32
        %v429 = vpop.permute.xlu0 %428
        %432 = vrot.lane.b32.xlu0 %v413, 40
        %v433 = vpop.permute.xlu0 %432
        %436 = vrot.lane.b32.xlu0 %v410, 48
        %v437 = vpop.permute.xlu0 %436
        %440 = vrot.lane.b32.xlu0 %v414, 56
        %v441 = vpop.permute.xlu0 %440
        %v443 = vsel %vm270, %v387, %v417
        %v444 = vsel %vm272, %v443, %v421
        %v445 = vsel %vm274, %v444, %v425
        %v446 = vsel %vm276, %v445, %v429
        %v447 = vsel %vm278, %v446, %v433
        %v448 = vsel %vm280, %v447, %v437
        %v449 = vsel %vm282, %v448, %v441
        %s450 = scalar_lea.vmem %s1, 4
        %v451 = vld [vmem:[%s450] sm:$0xf]
        %453 = vset.pattern.permute.xlu0 0
        %454 = vperm.xlu0 %453, %v451
        %v455 = vpop.permute.xlu0 %454
        %v457 = vlaneseq
        %v458 = vshrl.u32 %v457, 7
        %v459 = vsub.s32 0, %v458
        %v460 = vrot.slane %v449, %v459
        %v461 = vmul.f32 %v455, %v460
        %v462 = vadd.f32 %v325, %v461
        %463 = vset.pattern.permute.xlu0 1
        %464 = vperm.xlu0 %463, %v451
        %v465 = vpop.permute.xlu0 %464
        %v467 = vlaneseq
        %v468 = vshrl.u32 %v467, 7
        %v469 = vsub.s32 1, %v468
        %v470 = vrot.slane %v449, %v469
        %v471 = vmul.f32 %v465, %v470
        %v472 = vadd.f32 %v462, %v471
        %473 = vset.pattern.permute.xlu0 2
        %474 = vperm.xlu0 %473, %v451
        %v475 = vpop.permute.xlu0 %474
        %v477 = vlaneseq
        %v478 = vshrl.u32 %v477, 7
        %v479 = vsub.s32 2, %v478
        %v480 = vrot.slane %v449, %v479
        %v481 = vmul.f32 %v475, %v480
        %v482 = vadd.f32 %v472, %v481
        %483 = vset.pattern.permute.xlu0 3
        %484 = vperm.xlu0 %483, %v451
        %v485 = vpop.permute.xlu0 %484
        %v487 = vlaneseq
        %v488 = vshrl.u32 %v487, 7
        %v489 = vsub.s32 3, %v488
        %v490 = vrot.slane %v449, %v489
        %v491 = vmul.f32 %v485, %v490
        %v492 = vadd.f32 %v482, %v491
        %v493 = vld [vmem:[%s169] sm:$0xff]
        %v494 = vld [vmem:[%s169 + $0x10] sm:$0xff]
        %v495 = vld [vmem:[%s169 + $0x20] sm:$0xff]
        %v496 = vld [vmem:[%s169 + $0x30] sm:$0xff]
        %501 = vrot.lane.b32.xlu0 %v493, 127
        %v502 = vpop.permute.xlu0 %501
        %503 = vrot.lane.b32.xlu0 %v494, 127
        %v504 = vpop.permute.xlu0 %503
        %505 = vrot.lane.b32.xlu0 %v495, 127
        %v506 = vpop.permute.xlu0 %505
        %507 = vrot.lane.b32.xlu0 %v496, 127
        %v508 = vpop.permute.xlu0 %507
        %v513 = vcombine.low %v502, %v506
        %v514 = vcombine.high %v502, %v506
        %v516 = vunpack.c.l.s4 1983009808
        %v517 = vunpack.c.0.s8 %v516
        %v518 = vlaneseq
        %v519 = vshrl.u32 %v518, 7
        %v520 = vsub.s32 %v517, %v519
        %v521 = vrot.slane %v513, %v520
        %v523 = vunpack.c.l.s4 1983009808
        %v524 = vunpack.c.0.s8 %v523
        %v525 = vlaneseq
        %v526 = vshrl.u32 %v525, 7
        %v527 = vsub.s32 %v524, %v526
        %v528 = vrot.slane %v514, %v527
        %v529 = vcombine.low %v504, %v508
        %v530 = vcombine.high %v504, %v508
        %v532 = vunpack.c.l.s4 1983009808
        %v533 = vunpack.c.0.s8 %v532
        %v534 = vlaneseq
        %v535 = vshrl.u32 %v534, 7
        %v536 = vsub.s32 %v533, %v535
        %v537 = vrot.slane %v529, %v536
        %v539 = vunpack.c.l.s4 1983009808
        %v540 = vunpack.c.0.s8 %v539
        %v541 = vlaneseq
        %v542 = vshrl.u32 %v541, 7
        %v543 = vsub.s32 %v540, %v542
        %v544 = vrot.slane %v530, %v543
        %v545 = vcombine.low %v521, %v537
        %v546 = vcombine.high %v521, %v537
        %v548 = vunpack.c.l.s4 1934713408
        %v549 = vunpack.c.0.s8 %v548
        %v550 = vlaneseq
        %v551 = vshrl.u32 %v550, 7
        %v552 = vsub.s32 %v549, %v551
        %v553 = vrot.slane %v545, %v552
        %v555 = vunpack.c.l.s4 1934713408
        %v556 = vunpack.c.0.s8 %v555
        %v557 = vlaneseq
        %v558 = vshrl.u32 %v557, 7
        %v559 = vsub.s32 %v556, %v558
        %v560 = vrot.slane %v546, %v559
        %v561 = vcombine.low %v528, %v544
        %v562 = vcombine.high %v528, %v544
        %v564 = vunpack.c.l.s4 1934713408
        %v565 = vunpack.c.0.s8 %v564
        %v566 = vlaneseq
        %v567 = vshrl.u32 %v566, 7
        %v568 = vsub.s32 %v565, %v567
        %v569 = vrot.slane %v561, %v568
        %v571 = vunpack.c.l.s4 1934713408
        %v572 = vunpack.c.0.s8 %v571
        %v573 = vlaneseq
        %v574 = vshrl.u32 %v573, 7
        %v575 = vsub.s32 %v572, %v574
        %v576 = vrot.slane %v562, %v575
        %v577 = vcombine.high %v553, 0.0
        %v578 = vcombine.high %v560, 0.0
        %v579 = vcombine.high %v569, 0.0
        %v580 = vcombine.high %v576, 0.0
        %582 = vrot.lane.b32.xlu0 %v577, 8
        %v583 = vpop.permute.xlu0 %582
        %586 = vrot.lane.b32.xlu0 %v560, 16
        %v587 = vpop.permute.xlu0 %586
        %590 = vrot.lane.b32.xlu0 %v578, 24
        %v591 = vpop.permute.xlu0 %590
        %594 = vrot.lane.b32.xlu0 %v569, 32
        %v595 = vpop.permute.xlu0 %594
        %598 = vrot.lane.b32.xlu0 %v579, 40
        %v599 = vpop.permute.xlu0 %598
        %602 = vrot.lane.b32.xlu0 %v576, 48
        %v603 = vpop.permute.xlu0 %602
        %606 = vrot.lane.b32.xlu0 %v580, 56
        %v607 = vpop.permute.xlu0 %606
        %v609 = vsel %vm270, %v553, %v583
        %v610 = vsel %vm272, %v609, %v587
        %v611 = vsel %vm274, %v610, %v591
        %v612 = vsel %vm276, %v611, %v595
        %v613 = vsel %vm278, %v612, %v599
        %v614 = vsel %vm280, %v613, %v603
        %v615 = vsel %vm282, %v614, %v607
        %s616 = scalar_lea.vmem %s1, 8
        %v617 = vld [vmem:[%s616] sm:$0xf]
        %619 = vset.pattern.permute.xlu0 0
        %620 = vperm.xlu0 %619, %v617
        %v621 = vpop.permute.xlu0 %620
        %v623 = vlaneseq
        %v624 = vshrl.u32 %v623, 7
        %v625 = vsub.s32 0, %v624
        %v626 = vrot.slane %v615, %v625
        %v627 = vmul.f32 %v621, %v626
        %v628 = vadd.f32 %v492, %v627
        %629 = vset.pattern.permute.xlu0 1
        %630 = vperm.xlu0 %629, %v617
        %v631 = vpop.permute.xlu0 %630
        %v633 = vlaneseq
        %v634 = vshrl.u32 %v633, 7
        %v635 = vsub.s32 1, %v634
        %v636 = vrot.slane %v615, %v635
        %v637 = vmul.f32 %v631, %v636
        %v638 = vadd.f32 %v628, %v637
        %639 = vset.pattern.permute.xlu0 2
        %640 = vperm.xlu0 %639, %v617
        %v641 = vpop.permute.xlu0 %640
        %v643 = vlaneseq
        %v644 = vshrl.u32 %v643, 7
        %v645 = vsub.s32 2, %v644
        %v646 = vrot.slane %v615, %v645
        %v647 = vmul.f32 %v641, %v646
        %v648 = vadd.f32 %v638, %v647
        %649 = vset.pattern.permute.xlu0 3
        %650 = vperm.xlu0 %649, %v617
        %v651 = vpop.permute.xlu0 %650
        %v653 = vlaneseq
        %v654 = vshrl.u32 %v653, 7
        %v655 = vsub.s32 3, %v654
        %v656 = vrot.slane %v615, %v655
        %v657 = vmul.f32 %v651, %v656
        %v658 = vadd.f32 %v648, %v657
        %s659 = scalar_lea.vmem %s168, 64
        %v660 = vld [vmem:[%s659 + $0x1] sm:$0xff]
        %v661 = vld [vmem:[%s659 + $0x11] sm:$0xff]
        %v662 = vld [vmem:[%s659 + $0x21] sm:$0xff]
        %v663 = vld [vmem:[%s659 + $0x31] sm:$0xff]
        %v664 = vcombine.low %v660, %v662
        %v665 = vcombine.high %v660, %v662
        %v667 = vunpack.c.l.s4 1983009808
        %v668 = vunpack.c.0.s8 %v667
        %v669 = vlaneseq
        %v670 = vshrl.u32 %v669, 7
        %v671 = vsub.s32 %v668, %v670
        %v672 = vrot.slane %v664, %v671
        %v674 = vunpack.c.l.s4 1983009808
        %v675 = vunpack.c.0.s8 %v674
        %v676 = vlaneseq
        %v677 = vshrl.u32 %v676, 7
        %v678 = vsub.s32 %v675, %v677
        %v679 = vrot.slane %v665, %v678
        %v680 = vcombine.low %v661, %v663
        %v681 = vcombine.high %v661, %v663
        %v683 = vunpack.c.l.s4 1983009808
        %v684 = vunpack.c.0.s8 %v683
        %v685 = vlaneseq
        %v686 = vshrl.u32 %v685, 7
        %v687 = vsub.s32 %v684, %v686
        %v688 = vrot.slane %v680, %v687
        %v690 = vunpack.c.l.s4 1983009808
        %v691 = vunpack.c.0.s8 %v690
        %v692 = vlaneseq
        %v693 = vshrl.u32 %v692, 7
        %v694 = vsub.s32 %v691, %v693
        %v695 = vrot.slane %v681, %v694
        %v696 = vcombine.low %v672, %v688
        %v697 = vcombine.high %v672, %v688
        %v699 = vunpack.c.l.s4 1934713408
        %v700 = vunpack.c.0.s8 %v699
        %v701 = vlaneseq
        %v702 = vshrl.u32 %v701, 7
        %v703 = vsub.s32 %v700, %v702
        %v704 = vrot.slane %v696, %v703
        %v706 = vunpack.c.l.s4 1934713408
        %v707 = vunpack.c.0.s8 %v706
        %v708 = vlaneseq
        %v709 = vshrl.u32 %v708, 7
        %v710 = vsub.s32 %v707, %v709
        %v711 = vrot.slane %v697, %v710
        %v712 = vcombine.low %v679, %v695
        %v713 = vcombine.high %v679, %v695
        %v715 = vunpack.c.l.s4 1934713408
        %v716 = vunpack.c.0.s8 %v715
        %v717 = vlaneseq
        %v718 = vshrl.u32 %v717, 7
        %v719 = vsub.s32 %v716, %v718
        %v720 = vrot.slane %v712, %v719
        %v722 = vunpack.c.l.s4 1934713408
        %v723 = vunpack.c.0.s8 %v722
        %v724 = vlaneseq
        %v725 = vshrl.u32 %v724, 7
        %v726 = vsub.s32 %v723, %v725
        %v727 = vrot.slane %v713, %v726
        %v728 = vcombine.high %v704, 0.0
        %v729 = vcombine.high %v711, 0.0
        %v730 = vcombine.high %v720, 0.0
        %v731 = vcombine.high %v727, 0.0
        %733 = vrot.lane.b32.xlu0 %v728, 8
        %v734 = vpop.permute.xlu0 %733
        %737 = vrot.lane.b32.xlu0 %v711, 16
        %v738 = vpop.permute.xlu0 %737
        %741 = vrot.lane.b32.xlu0 %v729, 24
        %v742 = vpop.permute.xlu0 %741
        %745 = vrot.lane.b32.xlu0 %v720, 32
        %v746 = vpop.permute.xlu0 %745
        %749 = vrot.lane.b32.xlu0 %v730, 40
        %v750 = vpop.permute.xlu0 %749
        %753 = vrot.lane.b32.xlu0 %v727, 48
        %v754 = vpop.permute.xlu0 %753
        %757 = vrot.lane.b32.xlu0 %v731, 56
        %v758 = vpop.permute.xlu0 %757
        %v760 = vsel %vm270, %v704, %v734
        %v761 = vsel %vm272, %v760, %v738
        %v762 = vsel %vm274, %v761, %v742
        %v763 = vsel %vm276, %v762, %v746
        %v764 = vsel %vm278, %v763, %v750
        %v765 = vsel %vm280, %v764, %v754
        %v766 = vsel %vm282, %v765, %v758
        %s767 = scalar_lea.vmem %s1, 12
        %v768 = vld [vmem:[%s767] sm:$0xf]
        %770 = vset.pattern.permute.xlu0 0
        %771 = vperm.xlu0 %770, %v768
        %v772 = vpop.permute.xlu0 %771
        %v774 = vlaneseq
        %v775 = vshrl.u32 %v774, 7
        %v776 = vsub.s32 0, %v775
        %v777 = vrot.slane %v766, %v776
        %v778 = vmul.f32 %v772, %v777
        %v779 = vadd.f32 %v658, %v778
        %780 = vset.pattern.permute.xlu0 1
        %781 = vperm.xlu0 %780, %v768
        %v782 = vpop.permute.xlu0 %781
        %v784 = vlaneseq
        %v785 = vshrl.u32 %v784, 7
        %v786 = vsub.s32 1, %v785
        %v787 = vrot.slane %v766, %v786
        %v788 = vmul.f32 %v782, %v787
        %v789 = vadd.f32 %v779, %v788
        %790 = vset.pattern.permute.xlu0 2
        %791 = vperm.xlu0 %790, %v768
        %v792 = vpop.permute.xlu0 %791
        %v794 = vlaneseq
        %v795 = vshrl.u32 %v794, 7
        %v796 = vsub.s32 2, %v795
        %v797 = vrot.slane %v766, %v796
        %v798 = vmul.f32 %v792, %v797
        %v799 = vadd.f32 %v789, %v798
        %800 = vset.pattern.permute.xlu0 3
        %801 = vperm.xlu0 %800, %v768
        %v802 = vpop.permute.xlu0 %801
        %v804 = vlaneseq
        %v805 = vshrl.u32 %v804, 7
        %v806 = vsub.s32 3, %v805
        %v807 = vrot.slane %v766, %v806
        %v808 = vmul.f32 %v802, %v807
        %v809 = vadd.f32 %v799, %v808
        %v810 = vld [vmem:[%s168 + $0x1] sm:$0xff]
        %v811 = vld [vmem:[%s168 + $0x11] sm:$0xff]
        %v812 = vld [vmem:[%s168 + $0x21] sm:$0xff]
        %v813 = vld [vmem:[%s168 + $0x31] sm:$0xff]
        %818 = vrot.lane.b32.xlu0 %v810, 127
        %v819 = vpop.permute.xlu0 %818
        %820 = vrot.lane.b32.xlu0 %v811, 127
        %v821 = vpop.permute.xlu0 %820
        %822 = vrot.lane.b32.xlu0 %v812, 127
        %v823 = vpop.permute.xlu0 %822
        %824 = vrot.lane.b32.xlu0 %v813, 127
        %v825 = vpop.permute.xlu0 %824
        %v830 = vcombine.low %v819, %v823
        %v831 = vcombine.high %v819, %v823
        %v833 = vunpack.c.l.s4 1983009808
        %v834 = vunpack.c.0.s8 %v833
        %v835 = vlaneseq
        %v836 = vshrl.u32 %v835, 7
        %v837 = vsub.s32 %v834, %v836
        %v838 = vrot.slane %v830, %v837
        %v840 = vunpack.c.l.s4 1983009808
        %v841 = vunpack.c.0.s8 %v840
        %v842 = vlaneseq
        %v843 = vshrl.u32 %v842, 7
        %v844 = vsub.s32 %v841, %v843
        %v845 = vrot.slane %v831, %v844
        %v846 = vcombine.low %v821, %v825
        %v847 = vcombine.high %v821, %v825
        %v849 = vunpack.c.l.s4 1983009808
        %v850 = vunpack.c.0.s8 %v849
        %v851 = vlaneseq
        %v852 = vshrl.u32 %v851, 7
        %v853 = vsub.s32 %v850, %v852
        %v854 = vrot.slane %v846, %v853
        %v856 = vunpack.c.l.s4 1983009808
        %v857 = vunpack.c.0.s8 %v856
        %v858 = vlaneseq
        %v859 = vshrl.u32 %v858, 7
        %v860 = vsub.s32 %v857, %v859
        %v861 = vrot.slane %v847, %v860
        %v862 = vcombine.low %v838, %v854
        %v863 = vcombine.high %v838, %v854
        %v865 = vunpack.c.l.s4 1934713408
        %v866 = vunpack.c.0.s8 %v865
        %v867 = vlaneseq
        %v868 = vshrl.u32 %v867, 7
        %v869 = vsub.s32 %v866, %v868
        %v870 = vrot.slane %v862, %v869
        %v872 = vunpack.c.l.s4 1934713408
        %v873 = vunpack.c.0.s8 %v872
        %v874 = vlaneseq
        %v875 = vshrl.u32 %v874, 7
        %v876 = vsub.s32 %v873, %v875
        %v877 = vrot.slane %v863, %v876
        %v878 = vcombine.low %v845, %v861
        %v879 = vcombine.high %v845, %v861
        %v881 = vunpack.c.l.s4 1934713408
        %v882 = vunpack.c.0.s8 %v881
        %v883 = vlaneseq
        %v884 = vshrl.u32 %v883, 7
        %v885 = vsub.s32 %v882, %v884
        %v886 = vrot.slane %v878, %v885
        %v888 = vunpack.c.l.s4 1934713408
        %v889 = vunpack.c.0.s8 %v888
        %v890 = vlaneseq
        %v891 = vshrl.u32 %v890, 7
        %v892 = vsub.s32 %v889, %v891
        %v893 = vrot.slane %v879, %v892
        %v894 = vcombine.high %v870, 0.0
        %v895 = vcombine.high %v877, 0.0
        %v896 = vcombine.high %v886, 0.0
        %v897 = vcombine.high %v893, 0.0
        %899 = vrot.lane.b32.xlu0 %v894, 8
        %v900 = vpop.permute.xlu0 %899
        %903 = vrot.lane.b32.xlu0 %v877, 16
        %v904 = vpop.permute.xlu0 %903
        %907 = vrot.lane.b32.xlu0 %v895, 24
        %v908 = vpop.permute.xlu0 %907
        %911 = vrot.lane.b32.xlu0 %v886, 32
        %v912 = vpop.permute.xlu0 %911
        %915 = vrot.lane.b32.xlu0 %v896, 40
        %v916 = vpop.permute.xlu0 %915
        %919 = vrot.lane.b32.xlu0 %v893, 48
        %v920 = vpop.permute.xlu0 %919
        %923 = vrot.lane.b32.xlu0 %v897, 56
        %v924 = vpop.permute.xlu0 %923
        %v926 = vsel %vm270, %v870, %v900
        %v927 = vsel %vm272, %v926, %v904
        %v928 = vsel %vm274, %v927, %v908
        %v929 = vsel %vm276, %v928, %v912
        %v930 = vsel %vm278, %v929, %v916
        %v931 = vsel %vm280, %v930, %v920
        %v932 = vsel %vm282, %v931, %v924
        %s933 = scalar_lea.vmem %s1, 16
        %v934 = vld [vmem:[%s933] sm:$0xf]
        %936 = vset.pattern.permute.xlu0 0
        %937 = vperm.xlu0 %936, %v934
        %v938 = vpop.permute.xlu0 %937
        %v940 = vlaneseq
        %v941 = vshrl.u32 %v940, 7
        %v942 = vsub.s32 0, %v941
        %v943 = vrot.slane %v932, %v942
        %v944 = vmul.f32 %v938, %v943
        %v945 = vadd.f32 %v809, %v944
        %946 = vset.pattern.permute.xlu0 1
        %947 = vperm.xlu0 %946, %v934
        %v948 = vpop.permute.xlu0 %947
        %v950 = vlaneseq
        %v951 = vshrl.u32 %v950, 7
        %v952 = vsub.s32 1, %v951
        %v953 = vrot.slane %v932, %v952
        %v954 = vmul.f32 %v948, %v953
        %v955 = vadd.f32 %v945, %v954
        %956 = vset.pattern.permute.xlu0 2
        %957 = vperm.xlu0 %956, %v934
        %v958 = vpop.permute.xlu0 %957
        %v960 = vlaneseq
        %v961 = vshrl.u32 %v960, 7
        %v962 = vsub.s32 2, %v961
        %v963 = vrot.slane %v932, %v962
        %v964 = vmul.f32 %v958, %v963
        %v965 = vadd.f32 %v955, %v964
        %966 = vset.pattern.permute.xlu0 3
        %967 = vperm.xlu0 %966, %v934
        %v968 = vpop.permute.xlu0 %967
        %v970 = vlaneseq
        %v971 = vshrl.u32 %v970, 7
        %v972 = vsub.s32 3, %v971
        %v973 = vrot.slane %v932, %v972
        %v974 = vmul.f32 %v968, %v973
        %v975 = vadd.f32 %v965, %v974
        %v976 = vld [vmem:[%s659 + $0x1] sm:$0xff]
        %v977 = vld [vmem:[%s659 + $0x11] sm:$0xff]
        %v978 = vld [vmem:[%s659 + $0x21] sm:$0xff]
        %v979 = vld [vmem:[%s659 + $0x31] sm:$0xff]
        %984 = vrot.lane.b32.xlu0 %v976, 127
        %v985 = vpop.permute.xlu0 %984
        %986 = vrot.lane.b32.xlu0 %v977, 127
        %v987 = vpop.permute.xlu0 %986
        %988 = vrot.lane.b32.xlu0 %v978, 127
        %v989 = vpop.permute.xlu0 %988
        %990 = vrot.lane.b32.xlu0 %v979, 127
        %v991 = vpop.permute.xlu0 %990
        %v996 = vcombine.low %v985, %v989
        %v997 = vcombine.high %v985, %v989
        %v999 = vunpack.c.l.s4 1983009808
        %v1000 = vunpack.c.0.s8 %v999
        %v1001 = vlaneseq
        %v1002 = vshrl.u32 %v1001, 7
        %v1003 = vsub.s32 %v1000, %v1002
        %v1004 = vrot.slane %v996, %v1003
        %v1006 = vunpack.c.l.s4 1983009808
        %v1007 = vunpack.c.0.s8 %v1006
        %v1008 = vlaneseq
        %v1009 = vshrl.u32 %v1008, 7
        %v1010 = vsub.s32 %v1007, %v1009
        %v1011 = vrot.slane %v997, %v1010
        %v1012 = vcombine.low %v987, %v991
        %v1013 = vcombine.high %v987, %v991
        %v1015 = vunpack.c.l.s4 1983009808
        %v1016 = vunpack.c.0.s8 %v1015
        %v1017 = vlaneseq
        %v1018 = vshrl.u32 %v1017, 7
        %v1019 = vsub.s32 %v1016, %v1018
        %v1020 = vrot.slane %v1012, %v1019
        %v1022 = vunpack.c.l.s4 1983009808
        %v1023 = vunpack.c.0.s8 %v1022
        %v1024 = vlaneseq
        %v1025 = vshrl.u32 %v1024, 7
        %v1026 = vsub.s32 %v1023, %v1025
        %v1027 = vrot.slane %v1013, %v1026
        %v1028 = vcombine.low %v1004, %v1020
        %v1029 = vcombine.high %v1004, %v1020
        %v1031 = vunpack.c.l.s4 1934713408
        %v1032 = vunpack.c.0.s8 %v1031
        %v1033 = vlaneseq
        %v1034 = vshrl.u32 %v1033, 7
        %v1035 = vsub.s32 %v1032, %v1034
        %v1036 = vrot.slane %v1028, %v1035
        %v1038 = vunpack.c.l.s4 1934713408
        %v1039 = vunpack.c.0.s8 %v1038
        %v1040 = vlaneseq
        %v1041 = vshrl.u32 %v1040, 7
        %v1042 = vsub.s32 %v1039, %v1041
        %v1043 = vrot.slane %v1029, %v1042
        %v1044 = vcombine.low %v1011, %v1027
        %v1045 = vcombine.high %v1011, %v1027
        %v1047 = vunpack.c.l.s4 1934713408
        %v1048 = vunpack.c.0.s8 %v1047
        %v1049 = vlaneseq
        %v1050 = vshrl.u32 %v1049, 7
        %v1051 = vsub.s32 %v1048, %v1050
        %v1052 = vrot.slane %v1044, %v1051
        %v1054 = vunpack.c.l.s4 1934713408
        %v1055 = vunpack.c.0.s8 %v1054
        %v1056 = vlaneseq
        %v1057 = vshrl.u32 %v1056, 7
        %v1058 = vsub.s32 %v1055, %v1057
        %v1059 = vrot.slane %v1045, %v1058
        %v1060 = vcombine.high %v1036, 0.0
        %v1061 = vcombine.high %v1043, 0.0
        %v1062 = vcombine.high %v1052, 0.0
        %v1063 = vcombine.high %v1059, 0.0
        %1065 = vrot.lane.b32.xlu0 %v1060, 8
        %v1066 = vpop.permute.xlu0 %1065
        %1069 = vrot.lane.b32.xlu0 %v1043, 16
        %v1070 = vpop.permute.xlu0 %1069
        %1073 = vrot.lane.b32.xlu0 %v1061, 24
        %v1074 = vpop.permute.xlu0 %1073
        %1077 = vrot.lane.b32.xlu0 %v1052, 32
        %v1078 = vpop.permute.xlu0 %1077
        %1081 = vrot.lane.b32.xlu0 %v1062, 40
        %v1082 = vpop.permute.xlu0 %1081
        %1085 = vrot.lane.b32.xlu0 %v1059, 48
        %v1086 = vpop.permute.xlu0 %1085
        %1089 = vrot.lane.b32.xlu0 %v1063, 56
        %v1090 = vpop.permute.xlu0 %1089
        %v1092 = vsel %vm270, %v1036, %v1066
        %v1093 = vsel %vm272, %v1092, %v1070
        %v1094 = vsel %vm274, %v1093, %v1074
        %v1095 = vsel %vm276, %v1094, %v1078
        %v1096 = vsel %vm278, %v1095, %v1082
        %v1097 = vsel %vm280, %v1096, %v1086
        %v1098 = vsel %vm282, %v1097, %v1090
        %s1099 = scalar_lea.vmem %s1, 20
        %v1100 = vld [vmem:[%s1099] sm:$0xf]
        %1102 = vset.pattern.permute.xlu0 0
        %1103 = vperm.xlu0 %1102, %v1100
        %v1104 = vpop.permute.xlu0 %1103
        %v1106 = vlaneseq
        %v1107 = vshrl.u32 %v1106, 7
        %v1108 = vsub.s32 0, %v1107
        %v1109 = vrot.slane %v1098, %v1108
        %v1110 = vmul.f32 %v1104, %v1109
        %v1111 = vadd.f32 %v975, %v1110
        %1112 = vset.pattern.permute.xlu0 1
        %1113 = vperm.xlu0 %1112, %v1100
        %v1114 = vpop.permute.xlu0 %1113
        %v1116 = vlaneseq
        %v1117 = vshrl.u32 %v1116, 7
        %v1118 = vsub.s32 1, %v1117
        %v1119 = vrot.slane %v1098, %v1118
        %v1120 = vmul.f32 %v1114, %v1119
        %v1121 = vadd.f32 %v1111, %v1120
        %1122 = vset.pattern.permute.xlu0 2
        %1123 = vperm.xlu0 %1122, %v1100
        %v1124 = vpop.permute.xlu0 %1123
        %v1126 = vlaneseq
        %v1127 = vshrl.u32 %v1126, 7
        %v1128 = vsub.s32 2, %v1127
        %v1129 = vrot.slane %v1098, %v1128
        %v1130 = vmul.f32 %v1124, %v1129
        %v1131 = vadd.f32 %v1121, %v1130
        %1132 = vset.pattern.permute.xlu0 3
        %1133 = vperm.xlu0 %1132, %v1100
        %v1134 = vpop.permute.xlu0 %1133
        %v1136 = vlaneseq
        %v1137 = vshrl.u32 %v1136, 7
        %v1138 = vsub.s32 3, %v1137
        %v1139 = vrot.slane %v1098, %v1138
        %v1140 = vmul.f32 %v1134, %v1139
        %v1141 = vadd.f32 %v1131, %v1140
        %v1142 = vld [vmem:[%s169 + $0x1] sm:$0xff]
        %v1143 = vld [vmem:[%s169 + $0x11] sm:$0xff]
        %v1144 = vld [vmem:[%s169 + $0x21] sm:$0xff]
        %v1145 = vld [vmem:[%s169 + $0x31] sm:$0xff]
        %v1146 = vcombine.low %v1142, %v1144
        %v1147 = vcombine.high %v1142, %v1144
        %v1149 = vunpack.c.l.s4 1983009808
        %v1150 = vunpack.c.0.s8 %v1149
        %v1151 = vlaneseq
        %v1152 = vshrl.u32 %v1151, 7
        %v1153 = vsub.s32 %v1150, %v1152
        %v1154 = vrot.slane %v1146, %v1153
        %v1156 = vunpack.c.l.s4 1983009808
        %v1157 = vunpack.c.0.s8 %v1156
        %v1158 = vlaneseq
        %v1159 = vshrl.u32 %v1158, 7
        %v1160 = vsub.s32 %v1157, %v1159
        %v1161 = vrot.slane %v1147, %v1160
        %v1162 = vcombine.low %v1143, %v1145
        %v1163 = vcombine.high %v1143, %v1145
        %v1165 = vunpack.c.l.s4 1983009808
        %v1166 = vunpack.c.0.s8 %v1165
        %v1167 = vlaneseq
        %v1168 = vshrl.u32 %v1167, 7
        %v1169 = vsub.s32 %v1166, %v1168
        %v1170 = vrot.slane %v1162, %v1169
        %v1172 = vunpack.c.l.s4 1983009808
        %v1173 = vunpack.c.0.s8 %v1172
        %v1174 = vlaneseq
        %v1175 = vshrl.u32 %v1174, 7
        %v1176 = vsub.s32 %v1173, %v1175
        %v1177 = vrot.slane %v1163, %v1176
        %v1178 = vcombine.low %v1154, %v1170
        %v1179 = vcombine.high %v1154, %v1170
        %v1181 = vunpack.c.l.s4 1934713408
        %v1182 = vunpack.c.0.s8 %v1181
        %v1183 = vlaneseq
        %v1184 = vshrl.u32 %v1183, 7
        %v1185 = vsub.s32 %v1182, %v1184
        %v1186 = vrot.slane %v1178, %v1185
        %v1188 = vunpack.c.l.s4 1934713408
        %v1189 = vunpack.c.0.s8 %v1188
        %v1190 = vlaneseq
        %v1191 = vshrl.u32 %v1190, 7
        %v1192 = vsub.s32 %v1189, %v1191
        %v1193 = vrot.slane %v1179, %v1192
        %v1194 = vcombine.low %v1161, %v1177
        %v1195 = vcombine.high %v1161, %v1177
        %v1197 = vunpack.c.l.s4 1934713408
        %v1198 = vunpack.c.0.s8 %v1197
        %v1199 = vlaneseq
        %v1200 = vshrl.u32 %v1199, 7
        %v1201 = vsub.s32 %v1198, %v1200
        %v1202 = vrot.slane %v1194, %v1201
        %v1204 = vunpack.c.l.s4 1934713408
        %v1205 = vunpack.c.0.s8 %v1204
        %v1206 = vlaneseq
        %v1207 = vshrl.u32 %v1206, 7
        %v1208 = vsub.s32 %v1205, %v1207
        %v1209 = vrot.slane %v1195, %v1208
        %v1210 = vcombine.high %v1186, 0.0
        %v1211 = vcombine.high %v1193, 0.0
        %v1212 = vcombine.high %v1202, 0.0
        %v1213 = vcombine.high %v1209, 0.0
        %1215 = vrot.lane.b32.xlu0 %v1210, 8
        %v1216 = vpop.permute.xlu0 %1215
        %1219 = vrot.lane.b32.xlu0 %v1193, 16
        %v1220 = vpop.permute.xlu0 %1219
        %1223 = vrot.lane.b32.xlu0 %v1211, 24
        %v1224 = vpop.permute.xlu0 %1223
        %1227 = vrot.lane.b32.xlu0 %v1202, 32
        %v1228 = vpop.permute.xlu0 %1227
        %1231 = vrot.lane.b32.xlu0 %v1212, 40
        %v1232 = vpop.permute.xlu0 %1231
        %1235 = vrot.lane.b32.xlu0 %v1209, 48
        %v1236 = vpop.permute.xlu0 %1235
        %1239 = vrot.lane.b32.xlu0 %v1213, 56
        %v1240 = vpop.permute.xlu0 %1239
        %v1242 = vsel %vm270, %v1186, %v1216
        %v1243 = vsel %vm272, %v1242, %v1220
        %v1244 = vsel %vm274, %v1243, %v1224
        %v1245 = vsel %vm276, %v1244, %v1228
        %v1246 = vsel %vm278, %v1245, %v1232
        %v1247 = vsel %vm280, %v1246, %v1236
        %v1248 = vsel %vm282, %v1247, %v1240
        %s1249 = scalar_lea.vmem %s1, 24
        %v1250 = vld [vmem:[%s1249] sm:$0xf]
        %1252 = vset.pattern.permute.xlu0 0
        %1253 = vperm.xlu0 %1252, %v1250
        %v1254 = vpop.permute.xlu0 %1253
        %v1256 = vlaneseq
        %v1257 = vshrl.u32 %v1256, 7
        %v1258 = vsub.s32 0, %v1257
        %v1259 = vrot.slane %v1248, %v1258
        %v1260 = vmul.f32 %v1254, %v1259
        %v1261 = vadd.f32 %v1141, %v1260
        %1262 = vset.pattern.permute.xlu0 1
        %1263 = vperm.xlu0 %1262, %v1250
        %v1264 = vpop.permute.xlu0 %1263
        %v1266 = vlaneseq
        %v1267 = vshrl.u32 %v1266, 7
        %v1268 = vsub.s32 1, %v1267
        %v1269 = vrot.slane %v1248, %v1268
        %v1270 = vmul.f32 %v1264, %v1269
        %v1271 = vadd.f32 %v1261, %v1270
        %1272 = vset.pattern.permute.xlu0 2
        %1273 = vperm.xlu0 %1272, %v1250
        %v1274 = vpop.permute.xlu0 %1273
        %v1276 = vlaneseq
        %v1277 = vshrl.u32 %v1276, 7
        %v1278 = vsub.s32 2, %v1277
        %v1279 = vrot.slane %v1248, %v1278
        %v1280 = vmul.f32 %v1274, %v1279
        %v1281 = vadd.f32 %v1271, %v1280
        %1282 = vset.pattern.permute.xlu0 3
        %1283 = vperm.xlu0 %1282, %v1250
        %v1284 = vpop.permute.xlu0 %1283
        %v1286 = vlaneseq
        %v1287 = vshrl.u32 %v1286, 7
        %v1288 = vsub.s32 3, %v1287
        %v1289 = vrot.slane %v1248, %v1288
        %v1290 = vmul.f32 %v1284, %v1289
        %v1291 = vadd.f32 %v1281, %v1290
        %v1292 = vld [vmem:[%s326 + $0x1] sm:$0xff]
        %v1293 = vld [vmem:[%s326 + $0x11] sm:$0xff]
        %v1294 = vld [vmem:[%s326 + $0x21] sm:$0xff]
        %v1295 = vld [vmem:[%s326 + $0x31] sm:$0xff]
        %1300 = vrot.lane.b32.xlu0 %v1292, 127
        %v1301 = vpop.permute.xlu0 %1300
        %1302 = vrot.lane.b32.xlu0 %v1293, 127
        %v1303 = vpop.permute.xlu0 %1302
        %1304 = vrot.lane.b32.xlu0 %v1294, 127
        %v1305 = vpop.permute.xlu0 %1304
        %1306 = vrot.lane.b32.xlu0 %v1295, 127
        %v1307 = vpop.permute.xlu0 %1306
        %v1312 = vcombine.low %v1301, %v1305
        %v1313 = vcombine.high %v1301, %v1305
        %v1315 = vunpack.c.l.s4 1983009808
        %v1316 = vunpack.c.0.s8 %v1315
        %v1317 = vlaneseq
        %v1318 = vshrl.u32 %v1317, 7
        %v1319 = vsub.s32 %v1316, %v1318
        %v1320 = vrot.slane %v1312, %v1319
        %v1322 = vunpack.c.l.s4 1983009808
        %v1323 = vunpack.c.0.s8 %v1322
        %v1324 = vlaneseq
        %v1325 = vshrl.u32 %v1324, 7
        %v1326 = vsub.s32 %v1323, %v1325
        %v1327 = vrot.slane %v1313, %v1326
        %v1328 = vcombine.low %v1303, %v1307
        %v1329 = vcombine.high %v1303, %v1307
        %v1331 = vunpack.c.l.s4 1983009808
        %v1332 = vunpack.c.0.s8 %v1331
        %v1333 = vlaneseq
        %v1334 = vshrl.u32 %v1333, 7
        %v1335 = vsub.s32 %v1332, %v1334
        %v1336 = vrot.slane %v1328, %v1335
        %v1338 = vunpack.c.l.s4 1983009808
        %v1339 = vunpack.c.0.s8 %v1338
        %v1340 = vlaneseq
        %v1341 = vshrl.u32 %v1340, 7
        %v1342 = vsub.s32 %v1339, %v1341
        %v1343 = vrot.slane %v1329, %v1342
        %v1344 = vcombine.low %v1320, %v1336
        %v1345 = vcombine.high %v1320, %v1336
        %v1347 = vunpack.c.l.s4 1934713408
        %v1348 = vunpack.c.0.s8 %v1347
        %v1349 = vlaneseq
        %v1350 = vshrl.u32 %v1349, 7
        %v1351 = vsub.s32 %v1348, %v1350
        %v1352 = vrot.slane %v1344, %v1351
        %v1354 = vunpack.c.l.s4 1934713408
        %v1355 = vunpack.c.0.s8 %v1354
        %v1356 = vlaneseq
        %v1357 = vshrl.u32 %v1356, 7
        %v1358 = vsub.s32 %v1355, %v1357
        %v1359 = vrot.slane %v1345, %v1358
        %v1360 = vcombine.low %v1327, %v1343
        %v1361 = vcombine.high %v1327, %v1343
        %v1363 = vunpack.c.l.s4 1934713408
        %v1364 = vunpack.c.0.s8 %v1363
        %v1365 = vlaneseq
        %v1366 = vshrl.u32 %v1365, 7
        %v1367 = vsub.s32 %v1364, %v1366
        %v1368 = vrot.slane %v1360, %v1367
        %v1370 = vunpack.c.l.s4 1934713408
        %v1371 = vunpack.c.0.s8 %v1370
        %v1372 = vlaneseq
        %v1373 = vshrl.u32 %v1372, 7
        %v1374 = vsub.s32 %v1371, %v1373
        %v1375 = vrot.slane %v1361, %v1374
        %v1376 = vcombine.high %v1352, 0.0
        %v1377 = vcombine.high %v1359, 0.0
        %v1378 = vcombine.high %v1368, 0.0
        %v1379 = vcombine.high %v1375, 0.0
        %1381 = vrot.lane.b32.xlu0 %v1376, 8
        %v1382 = vpop.permute.xlu0 %1381
        %1385 = vrot.lane.b32.xlu0 %v1359, 16
        %v1386 = vpop.permute.xlu0 %1385
        %1389 = vrot.lane.b32.xlu0 %v1377, 24
        %v1390 = vpop.permute.xlu0 %1389
        %1393 = vrot.lane.b32.xlu0 %v1368, 32
        %v1394 = vpop.permute.xlu0 %1393
        %1397 = vrot.lane.b32.xlu0 %v1378, 40
        %v1398 = vpop.permute.xlu0 %1397
        %1401 = vrot.lane.b32.xlu0 %v1375, 48
        %v1402 = vpop.permute.xlu0 %1401
        %1405 = vrot.lane.b32.xlu0 %v1379, 56
        %v1406 = vpop.permute.xlu0 %1405
        %v1408 = vsel %vm270, %v1352, %v1382
        %v1409 = vsel %vm272, %v1408, %v1386
        %v1410 = vsel %vm274, %v1409, %v1390
        %v1411 = vsel %vm276, %v1410, %v1394
        %v1412 = vsel %vm278, %v1411, %v1398
        %v1413 = vsel %vm280, %v1412, %v1402
        %v1414 = vsel %vm282, %v1413, %v1406
        %s1415 = scalar_lea.vmem %s1, 28
        %v1416 = vld [vmem:[%s1415] sm:$0xf]
        %1418 = vset.pattern.permute.xlu0 0
        %1419 = vperm.xlu0 %1418, %v1416
        %v1420 = vpop.permute.xlu0 %1419
        %v1422 = vlaneseq
        %v1423 = vshrl.u32 %v1422, 7
        %v1424 = vsub.s32 0, %v1423
        %v1425 = vrot.slane %v1414, %v1424
        %v1426 = vmul.f32 %v1420, %v1425
        %v1427 = vadd.f32 %v1291, %v1426
        %1428 = vset.pattern.permute.xlu0 1
        %1429 = vperm.xlu0 %1428, %v1416
        %v1430 = vpop.permute.xlu0 %1429
        %v1432 = vlaneseq
        %v1433 = vshrl.u32 %v1432, 7
        %v1434 = vsub.s32 1, %v1433
        %v1435 = vrot.slane %v1414, %v1434
        %v1436 = vmul.f32 %v1430, %v1435
        %v1437 = vadd.f32 %v1427, %v1436
        %1438 = vset.pattern.permute.xlu0 2
        %1439 = vperm.xlu0 %1438, %v1416
        %v1440 = vpop.permute.xlu0 %1439
        %v1442 = vlaneseq
        %v1443 = vshrl.u32 %v1442, 7
        %v1444 = vsub.s32 2, %v1443
        %v1445 = vrot.slane %v1414, %v1444
        %v1446 = vmul.f32 %v1440, %v1445
        %v1447 = vadd.f32 %v1437, %v1446
        %1448 = vset.pattern.permute.xlu0 3
        %1449 = vperm.xlu0 %1448, %v1416
        %v1450 = vpop.permute.xlu0 %1449
        %v1452 = vlaneseq
        %v1453 = vshrl.u32 %v1452, 7
        %v1454 = vsub.s32 3, %v1453
        %v1455 = vrot.slane %v1414, %v1454
        %v1456 = vmul.f32 %v1450, %v1455
        %v1457 = vadd.f32 %v1447, %v1456
        %v1458 = vld [vmem:[%s169 + $0x1] sm:$0xff]
        %v1459 = vld [vmem:[%s169 + $0x11] sm:$0xff]
        %v1460 = vld [vmem:[%s169 + $0x21] sm:$0xff]
        %v1461 = vld [vmem:[%s169 + $0x31] sm:$0xff]
        %1466 = vrot.lane.b32.xlu0 %v1458, 127
        %v1467 = vpop.permute.xlu0 %1466
        %1468 = vrot.lane.b32.xlu0 %v1459, 127
        %v1469 = vpop.permute.xlu0 %1468
        %1470 = vrot.lane.b32.xlu0 %v1460, 127
        %v1471 = vpop.permute.xlu0 %1470
        %1472 = vrot.lane.b32.xlu0 %v1461, 127
        %v1473 = vpop.permute.xlu0 %1472
        %v1478 = vcombine.low %v1467, %v1471
        %v1479 = vcombine.high %v1467, %v1471
        %v1481 = vunpack.c.l.s4 1983009808
        %v1482 = vunpack.c.0.s8 %v1481
        %v1483 = vlaneseq
        %v1484 = vshrl.u32 %v1483, 7
        %v1485 = vsub.s32 %v1482, %v1484
        %v1486 = vrot.slane %v1478, %v1485
        %v1488 = vunpack.c.l.s4 1983009808
        %v1489 = vunpack.c.0.s8 %v1488
        %v1490 = vlaneseq
        %v1491 = vshrl.u32 %v1490, 7
        %v1492 = vsub.s32 %v1489, %v1491
        %v1493 = vrot.slane %v1479, %v1492
        %v1494 = vcombine.low %v1469, %v1473
        %v1495 = vcombine.high %v1469, %v1473
        %v1497 = vunpack.c.l.s4 1983009808
        %v1498 = vunpack.c.0.s8 %v1497
        %v1499 = vlaneseq
        %v1500 = vshrl.u32 %v1499, 7
        %v1501 = vsub.s32 %v1498, %v1500
        %v1502 = vrot.slane %v1494, %v1501
        %v1504 = vunpack.c.l.s4 1983009808
        %v1505 = vunpack.c.0.s8 %v1504
        %v1506 = vlaneseq
        %v1507 = vshrl.u32 %v1506, 7
        %v1508 = vsub.s32 %v1505, %v1507
        %v1509 = vrot.slane %v1495, %v1508
        %v1510 = vcombine.low %v1486, %v1502
        %v1511 = vcombine.high %v1486, %v1502
        %v1513 = vunpack.c.l.s4 1934713408
        %v1514 = vunpack.c.0.s8 %v1513
        %v1515 = vlaneseq
        %v1516 = vshrl.u32 %v1515, 7
        %v1517 = vsub.s32 %v1514, %v1516
        %v1518 = vrot.slane %v1510, %v1517
        %v1520 = vunpack.c.l.s4 1934713408
        %v1521 = vunpack.c.0.s8 %v1520
        %v1522 = vlaneseq
        %v1523 = vshrl.u32 %v1522, 7
        %v1524 = vsub.s32 %v1521, %v1523
        %v1525 = vrot.slane %v1511, %v1524
        %v1526 = vcombine.low %v1493, %v1509
        %v1527 = vcombine.high %v1493, %v1509
        %v1529 = vunpack.c.l.s4 1934713408
        %v1530 = vunpack.c.0.s8 %v1529
        %v1531 = vlaneseq
        %v1532 = vshrl.u32 %v1531, 7
        %v1533 = vsub.s32 %v1530, %v1532
        %v1534 = vrot.slane %v1526, %v1533
        %v1536 = vunpack.c.l.s4 1934713408
        %v1537 = vunpack.c.0.s8 %v1536
        %v1538 = vlaneseq
        %v1539 = vshrl.u32 %v1538, 7
        %v1540 = vsub.s32 %v1537, %v1539
        %v1541 = vrot.slane %v1527, %v1540
        %v1542 = vcombine.high %v1518, 0.0
        %v1543 = vcombine.high %v1525, 0.0
        %v1544 = vcombine.high %v1534, 0.0
        %v1545 = vcombine.high %v1541, 0.0
        %1547 = vrot.lane.b32.xlu0 %v1542, 8
        %v1548 = vpop.permute.xlu0 %1547
        %1551 = vrot.lane.b32.xlu0 %v1525, 16
        %v1552 = vpop.permute.xlu0 %1551
        %1555 = vrot.lane.b32.xlu0 %v1543, 24
        %v1556 = vpop.permute.xlu0 %1555
        %1559 = vrot.lane.b32.xlu0 %v1534, 32
        %v1560 = vpop.permute.xlu0 %1559
        %1563 = vrot.lane.b32.xlu0 %v1544, 40
        %v1564 = vpop.permute.xlu0 %1563
        %1567 = vrot.lane.b32.xlu0 %v1541, 48
        %v1568 = vpop.permute.xlu0 %1567
        %1571 = vrot.lane.b32.xlu0 %v1545, 56
        %v1572 = vpop.permute.xlu0 %1571
        %v1574 = vsel %vm270, %v1518, %v1548
        %v1575 = vsel %vm272, %v1574, %v1552
        %v1576 = vsel %vm274, %v1575, %v1556
        %v1577 = vsel %vm276, %v1576, %v1560
        %v1578 = vsel %vm278, %v1577, %v1564
        %v1579 = vsel %vm280, %v1578, %v1568
        %v1580 = vsel %vm282, %v1579, %v1572
        %s1581 = scalar_lea.vmem %s1, 32
        %v1582 = vld [vmem:[%s1581] sm:$0xf]
        %1584 = vset.pattern.permute.xlu0 0
        %1585 = vperm.xlu0 %1584, %v1582
        %v1586 = vpop.permute.xlu0 %1585
        %v1588 = vlaneseq
        %v1589 = vshrl.u32 %v1588, 7
        %v1590 = vsub.s32 0, %v1589
        %v1591 = vrot.slane %v1580, %v1590
        %v1592 = vmul.f32 %v1586, %v1591
        %v1593 = vadd.f32 %v1457, %v1592
        %1594 = vset.pattern.permute.xlu0 1
        %1595 = vperm.xlu0 %1594, %v1582
        %v1596 = vpop.permute.xlu0 %1595
        %v1598 = vlaneseq
        %v1599 = vshrl.u32 %v1598, 7
        %v1600 = vsub.s32 1, %v1599
        %v1601 = vrot.slane %v1580, %v1600
        %v1602 = vmul.f32 %v1596, %v1601
        %v1603 = vadd.f32 %v1593, %v1602
        %1604 = vset.pattern.permute.xlu0 2
        %1605 = vperm.xlu0 %1604, %v1582
        %v1606 = vpop.permute.xlu0 %1605
        %v1608 = vlaneseq
        %v1609 = vshrl.u32 %v1608, 7
        %v1610 = vsub.s32 2, %v1609
        %v1611 = vrot.slane %v1580, %v1610
        %v1612 = vmul.f32 %v1606, %v1611
        %v1613 = vadd.f32 %v1603, %v1612
        %1614 = vset.pattern.permute.xlu0 3
        %1615 = vperm.xlu0 %1614, %v1582
        %v1616 = vpop.permute.xlu0 %1615
        %v1618 = vlaneseq
        %v1619 = vshrl.u32 %v1618, 7
        %v1620 = vsub.s32 3, %v1619
        %v1621 = vrot.slane %v1580, %v1620
        %v1622 = vmul.f32 %v1616, %v1621
        %v1623 = vadd.f32 %v1613, %v1622
        %v1624 = vld [vmem:[%s2] sm:$0xf]
        %1626 = vset.pattern.permute.xlu0 0
        %1627 = vperm.xlu0 %1626, %v1624
        %v1628 = vpop.permute.xlu0 %1627
        %v1630 = vadd.f32 %v1623, %v1628
        %vm1631 = vcmask 519168
        %1632 = vst.msk [vmem:[%s163] sm:$0xf] %vm1631, %v1630
        %s1633 = sand.u32 %s93, 1
        %s1634 = scalar_lea.sflag [#allocation3], %s1633
        %s1635 = sand.u32 %s93, 1
        %s1636 = smul.addr %s1635, 4
        %s1637 = scalar_lea.vmem [#allocation2], %s1636
        // Predicated region
        $region33: #{tpu_custom_call.1} parent=31 // pred_check
          %p1638 = pneg %p103
        $region34: #{tpu_custom_call.1} parent=31 // pred_check_branch
          %1640 = sbr.rel (%p1638) target = $region36
        $region35: #{tpu_custom_call.1} parent=31 // pred_region
          %s1642 = ssub.s32 64, 64
          %1643 = vsyncadd %s1634, %s1642
          %s1644 = smul.addr %s17, 64
          %s1645 = scalar_lea.hbm %s3, %s1644
          %s1647 = sshll.u32 %s1637, 4
          %s1648 = int_to_ptr.vmem [resolvable:$true] %s1647
          %1650 = dma.vmem_to_hbm [thread:$0]  %s1648, 64, %s1645, %s1634
        $region36: #{tpu_custom_call.1} parent=31 // pred_fallthru
          _
      $region32: #{tpu_custom_call.1} parent=5 // pred_fallthru
        _
      %p1651 = scmp.le.s32.totalorder 2, %s12
      // Predicated region
      $region37: #{tpu_custom_call.1} parent=5 // pred_check
        %p1652 = pneg %p1651
      $region38: #{tpu_custom_call.1} parent=5 // pred_check_branch
        %1654 = sbr.rel (%p1652) target = $region40
      $region39: #{tpu_custom_call.1} parent=5 // pred_region
        %s1655 = ssub.s32 %s12, 2
        // Predicated region
        $region41: #{tpu_custom_call.1} parent=39 // pred_check
          %p1656 = pneg %p109
        $region42: #{tpu_custom_call.1} parent=39 // pred_check_branch
          %1658 = sbr.rel (%p1656) target = $region44
        $region43: #{tpu_custom_call.1} parent=39 // pred_region
          %s1659 = sand.u32 %s94, 1
          %s1660 = scalar_lea.sflag [#allocation3], %s1659
          %s1661 = sand.u32 %s94, 1
          %s1662 = smul.addr %s1661, 4
          %s1663 = scalar_lea.vmem [#allocation2], %s1662
          %1664 = dma.done %s1660, 64
        $region44: #{tpu_custom_call.1} parent=39 // pred_fallthru
          _
      $region40: #{tpu_custom_call.1} parent=5 // pred_fallthru
        _
    $region6: #{tpu_custom_call.1} parent=1 // loop_footer
      %s16 = sadd.s32 1, %s12
    $region7: #{tpu_custom_call.1} parent=1 // loop_footer_branch
      %11 = sbr.rel target = $region3
    $region8: #{tpu_custom_call.1} parent=1 // loop_exit
      _
    %1665 = vsyncpa [#allocation3], 1
    %s1666 = scalar_lea.sflag [#allocation3], 1
    %1667 = vsyncpa %s1666, 1

</llo_original>
